<compile_context>
chip_gen: v6e
topology: v6e:2x2x1
jax: 0.10.0
libtpu: 0.0.40
codegen_flags: <defaults>
</compile_context>

<pallas_src>
import functools

import numpy as np
import jax
import jax.numpy as jnp
from jax.experimental import pallas as pl
from jax.experimental.pallas import tpu as pltpu

D_PAD = 128  # lane-dense padding for every feature / hidden / output dim


# ----------------------------- fused Pallas kernel -----------------------------
def _gin_fused_kernel(adj_ref, feat_ref, w_ref, b_ref, wp_ref, bp_ref, out_ref, *,
                      n_gin_layers, n_mlp_layers):
    """Entire GIN forward for one graph of the batch, VMEM-resident.

    adj_ref : (1, N, N)   bf16   dense in-adjacency (copy_u + sum == adj @ h)
    feat_ref: (1, N, 128) bf16   zero-padded input node features
    w_ref   : (Lm, 128, 128) bf16   all MLP linear weights (resident across grid)
    b_ref   : (Lm, 128)      f32    all MLP linear biases
    wp_ref  : (H*128, 128)   bf16   prediction-head weights stacked along K
    bp_ref  : (1, 128)       f32    sum of prediction-head biases
    out_ref : (1, 1, 128)    f32    padded score_over_layer for this graph
    """
    adj = adj_ref[0]                      # (N, N) bf16
    h_bf = feat_ref[0]                    # (N, 128) bf16
    h_f32 = h_bf.astype(jnp.float32)
    b_all = b_ref[...]                    # (Lm, 128) f32, small

    def linear(x_bf, li, relu=False, residual=None):
        # bf16 x bf16 MXU matmul with f32 accumulation; f32 epilogue.
        y = jnp.dot(x_bf, w_ref[li], preferred_element_type=jnp.float32)
        y = y + b_all[li:li + 1, :]
        if residual is not None:
            y = y + residual
        if relu:
            y = jnp.maximum(y, 0.0)
        return y                           # f32

    def mlp(x_bf, li0, final_relu=False, final_residual=None):
        h = x_bf
        for j in range(n_mlp_layers - 1):
            h = linear(h, li0 + j, relu=True).astype(jnp.bfloat16)
        return linear(h, li0 + n_mlp_layers - 1,
                      relu=final_relu, residual=final_residual)

    # Pool each hidden representation immediately (XLU sublane reduce);
    # only the tiny (1,128) pooled rows survive to the epilogue.
    pooled = [jnp.sum(h_f32, axis=0, keepdims=True)]

    li = 0
    for _ in range(n_gin_layers):
        # neighbor sum aggregation: DGL copy_u + sum == adj @ h  (MXU)
        agg_bf = jnp.dot(adj, h_bf,
                         preferred_element_type=jnp.float32).astype(jnp.bfloat16)
        # StrongGIN: rst = feat + mlp1(agg)  (residual fused into mlp1's last linear)
        rst_bf = mlp(agg_bf, li, final_residual=h_f32).astype(jnp.bfloat16)
        li += n_mlp_layers
        # out = mlp2(rst); GIN's post-layer ReLU fused into mlp2's last linear
        h_f32 = mlp(rst_bf, li, final_relu=True)
        li += n_mlp_layers
        h_bf = h_f32.astype(jnp.bfloat16)
        pooled.append(jnp.sum(h_f32, axis=0, keepdims=True))

    # Fused prediction heads:  sum_l pooled_l @ W_l  ==  concat_l(pooled_l) @ stack_l(W_l)
    pooled_cat = jnp.concatenate(pooled, axis=1).astype(jnp.bfloat16)  # (1, H*128)
    score = jnp.dot(pooled_cat, wp_ref[...], preferred_element_type=jnp.float32)
    score = score + bp_ref[...]

    # TODO(synk): final_dropout implemented as eval-mode identity (no RNG drop).
    out_ref[0] = score


@functools.partial(jax.jit,
                   static_argnames=("n_gin_layers", "n_mlp_layers", "out_dim"))
def gin_forward(w_mlp, b_mlp, w_pred, b_pred, adj, feat, *,
                n_gin_layers, n_mlp_layers, out_dim):
    """adj: (B,N,N) bf16, feat: (B,N,128) bf16 (use prepare_inputs once)."""
    B, N, _ = adj.shape

    kernel = functools.partial(_gin_fused_kernel,
                               n_gin_layers=n_gin_layers,
                               n_mlp_layers=n_mlp_layers)
    out = pl.pallas_call(
        kernel,
        out_shape=jax.ShapeDtypeStruct((B, 1, D_PAD), jnp.float32),
        grid=(B,),
        in_specs=[
            pl.BlockSpec((1, N, N), lambda g: (g, 0, 0)),        # per-graph adj
            pl.BlockSpec((1, N, D_PAD), lambda g: (g, 0, 0)),    # per-graph feat
            pl.BlockSpec(w_mlp.shape, lambda g: (0, 0, 0)),      # weights: resident
            pl.BlockSpec(b_mlp.shape, lambda g: (0, 0)),
            pl.BlockSpec(w_pred.shape, lambda g: (0, 0)),
            pl.BlockSpec(b_pred.shape, lambda g: (0, 0)),
        ],
        out_specs=pl.BlockSpec((1, 1, D_PAD), lambda g: (g, 0, 0)),
        compiler_params=pltpu.CompilerParams(
            dimension_semantics=("parallel",)),   # shard graphs across v7x's 2 TCs
    )(adj, feat, w_mlp, b_mlp, w_pred, b_pred)
    return out[:, 0, :out_dim]


def prepare_inputs(adj, feat):
    """One-time layout plumbing: cast adj (exact 0/1) to bf16 and zero-pad the
    feature lanes to 128 in bf16.  Done once per dataset/batch, not per call."""
    B, N, in_dim = feat.shape
    feat_p = jnp.zeros((B, N, D_PAD), jnp.bfloat16).at[:, :, :in_dim].set(
        feat.astype(jnp.bfloat16))
    return adj.astype(jnp.bfloat16), feat_p


# ------------------------- parameter initialization -------------------------
def init_linear(key, in_dim, out_dim):
    kw, kb = jax.random.split(key)
    bound = 1.0 / (in_dim ** 0.5)
    w = jax.random.uniform(kw, (in_dim, out_dim), jnp.float32, -bound, bound)
    b = jax.random.uniform(kb, (out_dim,), jnp.float32, -bound, bound)
    return {"w": w, "b": b}


def init_mlp(key, num_layers, in_dim, hid_dim, out_dim):
    if num_layers == 1:
        dims = [(in_dim, out_dim)]
    else:
        dims = ([(in_dim, hid_dim)]
                + [(hid_dim, hid_dim)] * (num_layers - 2)
                + [(hid_dim, out_dim)])
    keys = jax.random.split(key, len(dims))
    return [init_linear(k, a, b) for k, (a, b) in zip(keys, dims)]


def init_gin(key, num_layers, num_mlp_layers, input_dim, hidden_dim, output_dim):
    params = {"gin_layers": [], "pred": []}
    for layer in range(num_layers - 1):
        key, k1, k2 = jax.random.split(key, 3)
        in_d = input_dim if layer == 0 else hidden_dim
        mlp1 = init_mlp(k1, num_mlp_layers, in_d, in_d, in_d)
        mlp2 = init_mlp(k2, num_mlp_layers, in_d, hidden_dim, hidden_dim)
        params["gin_layers"].append({"mlp1": mlp1, "mlp2": mlp2})
    for layer in range(num_layers):
        key, k = jax.random.split(key)
        in_d = input_dim if layer == 0 else hidden_dim
        params["pred"].append(init_linear(k, in_d, output_dim))
    return params


def pack_params(params):
    """Zero-pad every linear to 128 lanes, stack MLP weights/biases, stack the
    prediction heads along K (single fused matmul) and pre-sum their biases.
    Weights are stored in bf16 (MXU native), biases in f32 (epilogue dtype)."""

    def pad_w(w):
        in_d, out_d = w.shape
        return jnp.zeros((D_PAD, D_PAD), jnp.float32).at[:in_d, :out_d].set(w)

    def pad_b(b):
        return jnp.zeros((D_PAD,), jnp.float32).at[:b.shape[0]].set(b)

    ws, bs = [], []
    for layer in params["gin_layers"]:
        for lin in layer["mlp1"] + layer["mlp2"]:
            ws.append(pad_w(lin["w"]))
            bs.append(pad_b(lin["b"]))
    w_mlp = jnp.stack(ws).astype(jnp.bfloat16)          # (Lm, 128, 128) bf16
    b_mlp = jnp.stack(bs)                               # (Lm, 128) f32 (dense block)

    w_pred = jnp.concatenate([pad_w(p["w"]) for p in params["pred"]],
                             axis=0).astype(jnp.bfloat16)          # (H*128, 128)
    b_pred = sum(pad_b(p["b"]) for p in params["pred"]).reshape(1, D_PAD)  # (1,128) f32
    return w_mlp, b_mlp, w_pred, b_pred


# ------------------------- pure NumPy reference (f32) -------------------------
def gin_reference_np(params, adj, feat):
    def lin(p, x):
        return x @ np.asarray(p["w"], np.float32) + np.asarray(p["b"], np.float32)

    def mlp(ps, x):
        h = x
        for p in ps[:-1]:
            h = np.maximum(lin(p, h), 0.0)
        return lin(ps[-1], h)

    adj = np.asarray(adj, np.float32)
    h = np.asarray(feat, np.float32)
    hidden = [h]
    for layer in params["gin_layers"]:
        agg = adj @ h
        rst = mlp(layer["mlp1"], agg) + h
        h = np.maximum(mlp(layer["mlp2"], rst), 0.0)
        hidden.append(h)
    score = np.zeros((1, params["pred"][0]["w"].shape[1]), np.float32)
    for p, hr in zip(params["pred"], hidden):
        pooled = hr.sum(axis=0, keepdims=True)
        score = score + lin(p, pooled)
    return score


# ---------------------------------- main ----------------------------------
if __name__ == "__main__":
    key = jax.random.PRNGKey(0)

    # GIN(num_layers=3, num_mlp_layers=2, input_dim=16, hidden_dim=32,
    #     output_dim=8, final_dropout=0.5, learn_eps=False,
    #     graph_pooling_type='sum', neighbor_pooling_type='sum', model='sgin')
    B, N_NODES = 4, 32
    INPUT_DIM, HIDDEN_DIM, OUTPUT_DIM = 16, 32, 8
    NUM_LAYERS, NUM_MLP_LAYERS = 3, 2
    N_GIN_LAYERS = NUM_LAYERS - 1

    kp, kf, ka = jax.random.split(key, 3)
    params = init_gin(kp, NUM_LAYERS, NUM_MLP_LAYERS,
                      INPUT_DIM, HIDDEN_DIM, OUTPUT_DIM)
    w_mlp, b_mlp, w_pred, b_pred = pack_params(params)

    feat = jax.random.normal(kf, (B, N_NODES, INPUT_DIM), jnp.float32)

    # Deterministic random graphs; add a ring so every node has >=1 in-neighbor
    # (matches DGL's UDF reduce, which only runs on nonzero-degree nodes).
    adj = (jax.random.uniform(ka, (B, N_NODES, N_NODES)) < 0.15).astype(jnp.float32)
    ring = jnp.roll(jnp.eye(N_NODES, dtype=jnp.float32), 1, axis=1)[None]
    adj = jnp.maximum(adj, ring)
    adj = adj * (1.0 - jnp.eye(N_NODES, dtype=jnp.float32))[None]  # no self-loops

    adj_bf, feat_p = prepare_inputs(adj, feat)

    out = gin_forward(w_mlp, b_mlp, w_pred, b_pred, adj_bf, feat_p,
                      n_gin_layers=N_GIN_LAYERS,
                      n_mlp_layers=NUM_MLP_LAYERS,
                      out_dim=OUTPUT_DIM)
    out = jax.block_until_ready(out)
    assert out.shape == (B, OUTPUT_DIM)
    assert bool(jnp.all(jnp.isfinite(out)))

    # Check vs an exact-f32 NumPy reference (tolerance sized for bf16 MXU
    # inputs with f32 accumulation).
    ref = np.stack([gin_reference_np(params, np.asarray(adj[b]), np.asarray(feat[b]))[0]
                    for b in range(B)])
    np.testing.assert_allclose(np.asarray(out), ref, rtol=5e-2, atol=5e-1)

    print("KERNEL_OK")
</pallas_src>

<mosaic_0001>
module attributes {stable_mosaic.version = 11 : i64} {
  func.func @_gin_fused_kernel(%arg0: i32, %arg1: memref<1x32x32xbf16, #tpu.memory_space<vmem>>, %arg2: memref<1x32x128xbf16, #tpu.memory_space<vmem>>, %arg3: memref<8x128x128xbf16, #tpu.memory_space<vmem>>, %arg4: memref<8x128xf32, #tpu.memory_space<vmem>>, %arg5: memref<384x128xbf16, #tpu.memory_space<vmem>>, %arg6: memref<1x128xf32, #tpu.memory_space<vmem>>, %arg7: memref<1x1x128xf32, #tpu.memory_space<vmem>>) attributes {dimension_semantics = [#tpu.dimension_semantics<parallel>], iteration_bounds = array<i64: 4>, scalar_prefetch = 0 : i64, scratch_operands = 0 : i64, tpu.core_type = #tpu.core_type<tc>, window_params = [{transform_indices = @transform_0, window_bounds = array<i64: 1, 32, 32>}, {transform_indices = @transform_1, window_bounds = array<i64: 1, 32, 128>}, {pipeline_mode = #tpu.pipeline_mode<synchronous>, transform_indices = @transform_2, window_bounds = array<i64: 8, 128, 128>}, {pipeline_mode = #tpu.pipeline_mode<synchronous>, transform_indices = @transform_3, window_bounds = array<i64: 8, 128>}, {pipeline_mode = #tpu.pipeline_mode<synchronous>, transform_indices = @transform_4, window_bounds = array<i64: 384, 128>}, {pipeline_mode = #tpu.pipeline_mode<synchronous>, transform_indices = @transform_5, window_bounds = array<i64: 1, 128>}, {transform_indices = @transform_6, window_bounds = array<i64: 1, 1, 128>}]} {
    %c0 = arith.constant 0 : index
    %c0_0 = arith.constant 0 : index
    %c0_1 = arith.constant 0 : index
    %0 = vector.load %arg1[%c0, %c0_0, %c0_1] : memref<1x32x32xbf16, #tpu.memory_space<vmem>>, vector<1x32x32xbf16>
    %1 = vector.shape_cast %0 : vector<1x32x32xbf16> to vector<32x32xbf16>
    %c0_2 = arith.constant 0 : index
    %c0_3 = arith.constant 0 : index
    %c0_4 = arith.constant 0 : index
    %2 = vector.load %arg2[%c0_2, %c0_3, %c0_4] : memref<1x32x128xbf16, #tpu.memory_space<vmem>>, vector<1x32x128xbf16>
    %3 = vector.shape_cast %2 : vector<1x32x128xbf16> to vector<32x128xbf16>
    %4 = arith.extf %3 : vector<32x128xbf16> to vector<32x128xf32>
    %c0_5 = arith.constant 0 : index
    %c0_6 = arith.constant 0 : index
    %5 = vector.load %arg4[%c0_5, %c0_6] : memref<8x128xf32, #tpu.memory_space<vmem>>, vector<8x128xf32>
    %cst = arith.constant dense<0.000000e+00> : vector<128xf32>
    %6 = vector.multi_reduction <add>, %4, %cst [0] : vector<32x128xf32> to vector<128xf32>
    %7 = vector.shape_cast %6 : vector<128xf32> to vector<1x128xf32>
    %cst_7 = arith.constant dense<0.000000e+00> : vector<32x128xf32>
    %8 = tpu.matmul %1, %3, %cst_7 {dimension_numbers = #tpu.dot_dimension_numbers<[1], [0], [0], [1], [0, 0, 1, 1], [], []>} : vector<32x32xbf16>, vector<32x128xbf16>, vector<32x128xf32> -> vector<32x128xf32>
    %9 = arith.truncf %8 : vector<32x128xf32> to vector<32x128xbf16>
    %c0_8 = arith.constant 0 : index
    %c0_9 = arith.constant 0 : index
    %c0_10 = arith.constant 0 : index
    %10 = vector.load %arg3[%c0_8, %c0_9, %c0_10] : memref<8x128x128xbf16, #tpu.memory_space<vmem>>, vector<1x128x128xbf16>
    %11 = vector.shape_cast %10 : vector<1x128x128xbf16> to vector<128x128xbf16>
    %cst_11 = arith.constant dense<0.000000e+00> : vector<32x128xf32>
    %12 = tpu.matmul %9, %11, %cst_11 {dimension_numbers = #tpu.dot_dimension_numbers<[1], [0], [0], [1], [0, 0, 1, 1], [], []>} : vector<32x128xbf16>, vector<128x128xbf16>, vector<32x128xf32> -> vector<32x128xf32>
    %13 = vector.extract_strided_slice %5 {offsets = [0, 0], sizes = [1, 128], strides = [1, 1]} : vector<8x128xf32> to vector<1x128xf32>
    %14 = vector.broadcast %13 : vector<1x128xf32> to vector<32x128xf32>
    %15 = arith.addf %12, %14 : vector<32x128xf32>
    %cst_12 = arith.constant 0.000000e+00 : f32
    %16 = vector.broadcast %cst_12 : f32 to vector<32x128xf32>
    %17 = arith.maximumf %15, %16 : vector<32x128xf32>
    %18 = arith.truncf %17 : vector<32x128xf32> to vector<32x128xbf16>
    %c1 = arith.constant 1 : index
    %c0_13 = arith.constant 0 : index
    %c0_14 = arith.constant 0 : index
    %19 = vector.load %arg3[%c1, %c0_13, %c0_14] : memref<8x128x128xbf16, #tpu.memory_space<vmem>>, vector<1x128x128xbf16>
    %20 = vector.shape_cast %19 : vector<1x128x128xbf16> to vector<128x128xbf16>
    %cst_15 = arith.constant dense<0.000000e+00> : vector<32x128xf32>
    %21 = tpu.matmul %18, %20, %cst_15 {dimension_numbers = #tpu.dot_dimension_numbers<[1], [0], [0], [1], [0, 0, 1, 1], [], []>} : vector<32x128xbf16>, vector<128x128xbf16>, vector<32x128xf32> -> vector<32x128xf32>
    %22 = vector.extract_strided_slice %5 {offsets = [1, 0], sizes = [1, 128], strides = [1, 1]} : vector<8x128xf32> to vector<1x128xf32>
    %23 = vector.broadcast %22 : vector<1x128xf32> to vector<32x128xf32>
    %24 = arith.addf %21, %23 : vector<32x128xf32>
    %25 = arith.addf %24, %4 : vector<32x128xf32>
    %26 = arith.truncf %25 : vector<32x128xf32> to vector<32x128xbf16>
    %c2 = arith.constant 2 : index
    %c0_16 = arith.constant 0 : index
    %c0_17 = arith.constant 0 : index
    %27 = vector.load %arg3[%c2, %c0_16, %c0_17] : memref<8x128x128xbf16, #tpu.memory_space<vmem>>, vector<1x128x128xbf16>
    %28 = vector.shape_cast %27 : vector<1x128x128xbf16> to vector<128x128xbf16>
    %cst_18 = arith.constant dense<0.000000e+00> : vector<32x128xf32>
    %29 = tpu.matmul %26, %28, %cst_18 {dimension_numbers = #tpu.dot_dimension_numbers<[1], [0], [0], [1], [0, 0, 1, 1], [], []>} : vector<32x128xbf16>, vector<128x128xbf16>, vector<32x128xf32> -> vector<32x128xf32>
    %30 = vector.extract_strided_slice %5 {offsets = [2, 0], sizes = [1, 128], strides = [1, 1]} : vector<8x128xf32> to vector<1x128xf32>
    %31 = vector.broadcast %30 : vector<1x128xf32> to vector<32x128xf32>
    %32 = arith.addf %29, %31 : vector<32x128xf32>
    %cst_19 = arith.constant 0.000000e+00 : f32
    %33 = vector.broadcast %cst_19 : f32 to vector<32x128xf32>
    %34 = arith.maximumf %32, %33 : vector<32x128xf32>
    %35 = arith.truncf %34 : vector<32x128xf32> to vector<32x128xbf16>
    %c3 = arith.constant 3 : index
    %c0_20 = arith.constant 0 : index
    %c0_21 = arith.constant 0 : index
    %36 = vector.load %arg3[%c3, %c0_20, %c0_21] : memref<8x128x128xbf16, #tpu.memory_space<vmem>>, vector<1x128x128xbf16>
    %37 = vector.shape_cast %36 : vector<1x128x128xbf16> to vector<128x128xbf16>
    %cst_22 = arith.constant dense<0.000000e+00> : vector<32x128xf32>
    %38 = tpu.matmul %35, %37, %cst_22 {dimension_numbers = #tpu.dot_dimension_numbers<[1], [0], [0], [1], [0, 0, 1, 1], [], []>} : vector<32x128xbf16>, vector<128x128xbf16>, vector<32x128xf32> -> vector<32x128xf32>
    %39 = vector.extract_strided_slice %5 {offsets = [3, 0], sizes = [1, 128], strides = [1, 1]} : vector<8x128xf32> to vector<1x128xf32>
    %40 = vector.broadcast %39 : vector<1x128xf32> to vector<32x128xf32>
    %41 = arith.addf %38, %40 : vector<32x128xf32>
    %cst_23 = arith.constant 0.000000e+00 : f32
    %42 = vector.broadcast %cst_23 : f32 to vector<32x128xf32>
    %43 = arith.maximumf %41, %42 : vector<32x128xf32>
    %44 = arith.truncf %43 : vector<32x128xf32> to vector<32x128xbf16>
    %cst_24 = arith.constant dense<0.000000e+00> : vector<128xf32>
    %45 = vector.multi_reduction <add>, %43, %cst_24 [0] : vector<32x128xf32> to vector<128xf32>
    %46 = vector.shape_cast %45 : vector<128xf32> to vector<1x128xf32>
    %cst_25 = arith.constant dense<0.000000e+00> : vector<32x128xf32>
    %47 = tpu.matmul %1, %44, %cst_25 {dimension_numbers = #tpu.dot_dimension_numbers<[1], [0], [0], [1], [0, 0, 1, 1], [], []>} : vector<32x32xbf16>, vector<32x128xbf16>, vector<32x128xf32> -> vector<32x128xf32>
    %48 = arith.truncf %47 : vector<32x128xf32> to vector<32x128xbf16>
    %c4 = arith.constant 4 : index
    %c0_26 = arith.constant 0 : index
    %c0_27 = arith.constant 0 : index
    %49 = vector.load %arg3[%c4, %c0_26, %c0_27] : memref<8x128x128xbf16, #tpu.memory_space<vmem>>, vector<1x128x128xbf16>
    %50 = vector.shape_cast %49 : vector<1x128x128xbf16> to vector<128x128xbf16>
    %cst_28 = arith.constant dense<0.000000e+00> : vector<32x128xf32>
    %51 = tpu.matmul %48, %50, %cst_28 {dimension_numbers = #tpu.dot_dimension_numbers<[1], [0], [0], [1], [0, 0, 1, 1], [], []>} : vector<32x128xbf16>, vector<128x128xbf16>, vector<32x128xf32> -> vector<32x128xf32>
    %52 = vector.extract_strided_slice %5 {offsets = [4, 0], sizes = [1, 128], strides = [1, 1]} : vector<8x128xf32> to vector<1x128xf32>
    %53 = vector.broadcast %52 : vector<1x128xf32> to vector<32x128xf32>
    %54 = arith.addf %51, %53 : vector<32x128xf32>
    %cst_29 = arith.constant 0.000000e+00 : f32
    %55 = vector.broadcast %cst_29 : f32 to vector<32x128xf32>
    %56 = arith.maximumf %54, %55 : vector<32x128xf32>
    %57 = arith.truncf %56 : vector<32x128xf32> to vector<32x128xbf16>
    %c5 = arith.constant 5 : index
    %c0_30 = arith.constant 0 : index
    %c0_31 = arith.constant 0 : index
    %58 = vector.load %arg3[%c5, %c0_30, %c0_31] : memref<8x128x128xbf16, #tpu.memory_space<vmem>>, vector<1x128x128xbf16>
    %59 = vector.shape_cast %58 : vector<1x128x128xbf16> to vector<128x128xbf16>
    %cst_32 = arith.constant dense<0.000000e+00> : vector<32x128xf32>
    %60 = tpu.matmul %57, %59, %cst_32 {dimension_numbers = #tpu.dot_dimension_numbers<[1], [0], [0], [1], [0, 0, 1, 1], [], []>} : vector<32x128xbf16>, vector<128x128xbf16>, vector<32x128xf32> -> vector<32x128xf32>
    %61 = vector.extract_strided_slice %5 {offsets = [5, 0], sizes = [1, 128], strides = [1, 1]} : vector<8x128xf32> to vector<1x128xf32>
    %62 = vector.broadcast %61 : vector<1x128xf32> to vector<32x128xf32>
    %63 = arith.addf %60, %62 : vector<32x128xf32>
    %64 = arith.addf %63, %43 : vector<32x128xf32>
    %65 = arith.truncf %64 : vector<32x128xf32> to vector<32x128xbf16>
    %c6 = arith.constant 6 : index
    %c0_33 = arith.constant 0 : index
    %c0_34 = arith.constant 0 : index
    %66 = vector.load %arg3[%c6, %c0_33, %c0_34] : memref<8x128x128xbf16, #tpu.memory_space<vmem>>, vector<1x128x128xbf16>
    %67 = vector.shape_cast %66 : vector<1x128x128xbf16> to vector<128x128xbf16>
    %cst_35 = arith.constant dense<0.000000e+00> : vector<32x128xf32>
    %68 = tpu.matmul %65, %67, %cst_35 {dimension_numbers = #tpu.dot_dimension_numbers<[1], [0], [0], [1], [0, 0, 1, 1], [], []>} : vector<32x128xbf16>, vector<128x128xbf16>, vector<32x128xf32> -> vector<32x128xf32>
    %69 = vector.extract_strided_slice %5 {offsets = [6, 0], sizes = [1, 128], strides = [1, 1]} : vector<8x128xf32> to vector<1x128xf32>
    %70 = vector.broadcast %69 : vector<1x128xf32> to vector<32x128xf32>
    %71 = arith.addf %68, %70 : vector<32x128xf32>
    %cst_36 = arith.constant 0.000000e+00 : f32
    %72 = vector.broadcast %cst_36 : f32 to vector<32x128xf32>
    %73 = arith.maximumf %71, %72 : vector<32x128xf32>
    %74 = arith.truncf %73 : vector<32x128xf32> to vector<32x128xbf16>
    %c7 = arith.constant 7 : index
    %c0_37 = arith.constant 0 : index
    %c0_38 = arith.constant 0 : index
    %75 = vector.load %arg3[%c7, %c0_37, %c0_38] : memref<8x128x128xbf16, #tpu.memory_space<vmem>>, vector<1x128x128xbf16>
    %76 = vector.shape_cast %75 : vector<1x128x128xbf16> to vector<128x128xbf16>
    %cst_39 = arith.constant dense<0.000000e+00> : vector<32x128xf32>
    %77 = tpu.matmul %74, %76, %cst_39 {dimension_numbers = #tpu.dot_dimension_numbers<[1], [0], [0], [1], [0, 0, 1, 1], [], []>} : vector<32x128xbf16>, vector<128x128xbf16>, vector<32x128xf32> -> vector<32x128xf32>
    %78 = vector.extract_strided_slice %5 {offsets = [7, 0], sizes = [1, 128], strides = [1, 1]} : vector<8x128xf32> to vector<1x128xf32>
    %79 = vector.broadcast %78 : vector<1x128xf32> to vector<32x128xf32>
    %80 = arith.addf %77, %79 : vector<32x128xf32>
    %cst_40 = arith.constant 0.000000e+00 : f32
    %81 = vector.broadcast %cst_40 : f32 to vector<32x128xf32>
    %82 = arith.maximumf %80, %81 : vector<32x128xf32>
    %cst_41 = arith.constant dense<0.000000e+00> : vector<128xf32>
    %83 = vector.multi_reduction <add>, %82, %cst_41 [0] : vector<32x128xf32> to vector<128xf32>
    %84 = vector.shape_cast %83 : vector<128xf32> to vector<1x128xf32>
    %85 = tpu.concatenate %7, %46, %84 in 1 : vector<1x128xf32>, vector<1x128xf32>, vector<1x128xf32> -> vector<1x384xf32>
    %86 = arith.truncf %85 : vector<1x384xf32> to vector<1x384xbf16>
    %c0_42 = arith.constant 0 : index
    %c0_43 = arith.constant 0 : index
    %87 = vector.load %arg5[%c0_42, %c0_43] : memref<384x128xbf16, #tpu.memory_space<vmem>>, vector<384x128xbf16>
    %cst_44 = arith.constant dense<0.000000e+00> : vector<1x128xf32>
    %88 = tpu.matmul %86, %87, %cst_44 {dimension_numbers = #tpu.dot_dimension_numbers<[1], [0], [0], [1], [0, 0, 1, 1], [], []>} : vector<1x384xbf16>, vector<384x128xbf16>, vector<1x128xf32> -> vector<1x128xf32>
    %c0_45 = arith.constant 0 : index
    %c0_46 = arith.constant 0 : index
    %89 = vector.load %arg6[%c0_45, %c0_46] : memref<1x128xf32, #tpu.memory_space<vmem>>, vector<1x128xf32>
    %90 = arith.addf %88, %89 : vector<1x128xf32>
    %c0_47 = arith.constant 0 : index
    %c0_48 = arith.constant 0 : index
    %c0_49 = arith.constant 0 : index
    %91 = vector.load %arg7[%c0_47, %c0_48, %c0_49] : memref<1x1x128xf32, #tpu.memory_space<vmem>>, vector<1x1x128xf32>
    %92 = vector.shape_cast %91 : vector<1x1x128xf32> to vector<1x128xf32>
    %93 = vector.shape_cast %90 : vector<1x128xf32> to vector<1x1x128xf32>
    tpu.vector_store %arg7[%c0_47, %c0_48, %c0_49], %93 {strides = array<i32>} : memref<1x1x128xf32, #tpu.memory_space<vmem>>, vector<1x1x128xf32>,
    return
  }
  func.func @transform_0(%arg0: i32) -> (i32, i32, i32) {
    %c0_i32 = arith.constant 0 : i32
    %c0_i32_0 = arith.constant 0 : i32
    %c0_i32_1 = arith.constant 0 : i32
    return %arg0, %c0_i32, %c0_i32_0 : i32, i32, i32
  }
  func.func @transform_1(%arg0: i32) -> (i32, i32, i32) {
    %c0_i32 = arith.constant 0 : i32
    %c0_i32_0 = arith.constant 0 : i32
    %c0_i32_1 = arith.constant 0 : i32
    return %arg0, %c0_i32, %c0_i32_0 : i32, i32, i32
  }
  func.func @transform_2(%arg0: i32) -> (i32, i32, i32) {
    %c0_i32 = arith.constant 0 : i32
    %c0_i32_0 = arith.constant 0 : i32
    %c0_i32_1 = arith.constant 0 : i32
    %c0_i32_2 = arith.constant 0 : i32
    return %c0_i32, %c0_i32_0, %c0_i32_1 : i32, i32, i32
  }
  func.func @transform_3(%arg0: i32) -> (i32, i32) {
    %c0_i32 = arith.constant 0 : i32
    %c0_i32_0 = arith.constant 0 : i32
    %c0_i32_1 = arith.constant 0 : i32
    return %c0_i32, %c0_i32_0 : i32, i32
  }
  func.func @transform_4(%arg0: i32) -> (i32, i32) {
    %c0_i32 = arith.constant 0 : i32
    %c0_i32_0 = arith.constant 0 : i32
    %c0_i32_1 = arith.constant 0 : i32
    return %c0_i32, %c0_i32_0 : i32, i32
  }
  func.func @transform_5(%arg0: i32) -> (i32, i32) {
    %c0_i32 = arith.constant 0 : i32
    %c0_i32_0 = arith.constant 0 : i32
    %c0_i32_1 = arith.constant 0 : i32
    return %c0_i32, %c0_i32_0 : i32, i32
  }
  func.func @transform_6(%arg0: i32) -> (i32, i32, i32) {
    %c0_i32 = arith.constant 0 : i32
    %c0_i32_0 = arith.constant 0 : i32
    %c0_i32_1 = arith.constant 0 : i32
    return %arg0, %c0_i32, %c0_i32_0 : i32, i32, i32
  }
}

</mosaic_0001>

<llo_original>
// kernel: gin_forward.1
$region0: #{gin_forward.1}
  #allocation0 [shape = 'u32[]', space=smem, size = 0x4, offset = 0x4, fixed_abs, tag = 'smem constant byte address 0x4 - core index']
  #allocation1 [shape = 'u32[144,128]{1,0:T(1,128)}', space=vmem, size = 0x12000, scoped, tag = 'internal scratch']
  %s0 = inlined_call_operand.hbm [shape: bf16[4,32,32], index: 0, kind: input, shape index: {}]
  %s1 = inlined_call_operand.hbm [shape: bf16[4,32,128], index: 1, kind: input, shape index: {}]
  %s2 = inlined_call_operand.hbm [shape: bf16[8,128,128], index: 2, kind: input, shape index: {}]
  %s3 = inlined_call_operand.hbm [shape: f32[8,128], index: 3, kind: input, shape index: {}]
  %s4 = inlined_call_operand.hbm [shape: bf16[384,128], index: 4, kind: input, shape index: {}]
  %s5 = inlined_call_operand.vmem [shape: f32[1,128], index: 5, kind: input, shape index: {}]
  %s6 = inlined_call_operand.hbm [shape: f32[4,1,128], index: 6, kind: output, shape index: {}]
  %s7 = sld [smem:[#allocation0]]
  $region77: #{gin_forward.1} parent=0
    _
  %s9 = ssub.s32 1, %s7
  %s10 = scalar_select 0, %s9, %s7
  $region1: #{gin_forward.1} parent=0
    #allocation2 [shape = 'u8[16384]{0}', space=vmem, size = 0x4000, scoped, tag = 'input window, operand 0']
    #allocation3 [shape = 's32[2]{0}', space=sflag, size = 0x8, scoped, tag = 'scoped memory for gin_forward.1']
    #allocation4 [shape = 's32[2]{0}', space=sflag, size = 0x8, scoped, tag = 'scoped memory for gin_forward.1']
    #allocation5 [shape = 'u8[16384]{0}', space=vmem, size = 0x4000, scoped, tag = 'input window, operand 1']
    #allocation6 [shape = 's32[2]{0}', space=sflag, size = 0x8, scoped, tag = 'scoped memory for gin_forward.1']
    #allocation7 [shape = 'u8[262144]{0}', space=vmem, size = 0x40000, scoped, tag = 'input window, operand 2, single buffered']
    #allocation8 [shape = 'u8[4096]{0}', space=vmem, size = 0x1000, scoped, tag = 'input window, operand 3, single buffered']
    #allocation9 [shape = 's32[1]{0}', space=sflag, size = 0x4, scoped, tag = 'scoped memory for gin_forward.1']
    #allocation10 [shape = 'u8[98304]{0}', space=vmem, size = 0x18000, scoped, tag = 'input window, operand 4, single buffered']
    #allocation11 [shape = 'u8[1024]{0}', space=vmem, size = 0x400, scoped, tag = 'output window, operand 0']
    %11 = vsyncpa [#allocation3], 0
    %s12 = scalar_lea.sflag [#allocation3], 1
    %13 = vsyncpa %s12, 0
    %14 = vsyncpa [#allocation6], 0
    %s15 = scalar_lea.sflag [#allocation6], 1
    %16 = vsyncpa %s15, 0
    %17 = vsyncpa [#allocation9], 0
    %18 = vsyncpa [#allocation4], 0
    %s19 = scalar_lea.sflag [#allocation4], 1
    %20 = vsyncpa %s19, 0
    loop: start=0, step=1, limit=6
    $region2: #{gin_forward.1} parent=1 // loop_pre_header
      _
    $region3: #{gin_forward.1} parent=1 // loop_header
      %s22 = sphi 0, %s26
      %p23 = scmp.ge.s32.totalorder %s22, 6
      %s32 = sphi 0, %s34
      %s35 = sphi 0, %s32
      %s36 = sphi 0, %s35
      %s52 = sphi 0, %s36
      %s58 = sphi 0, %s60
      %s61 = sphi 0, %s58
      %s62 = sphi 0, %s61
      %s78 = sphi 0, %s62
      %s82 = sphi 0, %s82
      %s84 = sphi 0, %s82
      %s85 = sphi 0, %s84
      %s99 = sphi 0, %s85
      %s103 = sphi 0, %s103
      %s105 = sphi 0, %s103
      %s106 = sphi 0, %s105
      %s120 = sphi 0, %s106
      %s124 = sphi 0, %s124
      %s126 = sphi 0, %s124
      %s127 = sphi 0, %s126
      %s141 = sphi 0, %s127
      %s145 = sphi 0, %s145
      %s147 = sphi 0, %s145
      %s148 = sphi 0, %s147
      %s162 = sphi 0, %s148
      %s168 = sphi 0, %s170
      %s171 = sphi 0, %s168
      %s172 = sphi 0, %s171
      %s188 = sphi 0, %s172
    $region4: #{gin_forward.1} parent=1 // loop_header_branch
      %25 = sbr.rel (%p23) target = $region8
    $region5: #{gin_forward.1} parent=1 // loop_body
      %s27 = ssub.s32 %s22, 1
      %s28 = ssub.s32 %s22, 2
      %s29 = sadd.s32 %s22, 1
      %s30 = ssub.s32 %s22, %s29
      %p31 = scmp.eq.s32.totalorder %s30, 0
      %s33 = sadd.s32 %s32, 1
      %s34 = scalar_select %p31, %s32, %s33
      %p37 = pneg %p31
      %p38 = scmp.eq.s32.totalorder %s22, 3
      %p39 = por %p37, %p38
      %p40 = scmp.ne.s32.totalorder %s32, %s35
      %p41 = scmp.eq.s32.totalorder %s22, 0
      %p42 = por %p40, %p41
      %p43 = scmp.ne.s32.totalorder %s32, %s35
      %p44 = scmp.eq.s32.totalorder %s27, 3
      %p45 = por %p43, %p44
      %p46 = scmp.ne.s32.totalorder %s35, %s36
      %p47 = scmp.eq.s32.totalorder %s27, 0
      %p48 = por %p46, %p47
      %p49 = scmp.ne.s32.totalorder %s35, %s36
      %p50 = scmp.eq.s32.totalorder %s28, 3
      %p51 = por %p49, %p50
      %p53 = scmp.ne.s32.totalorder %s36, %s52
      %p54 = scmp.eq.s32.totalorder %s28, 0
      %p55 = por %p53, %p54
      %s56 = ssub.s32 %s22, %s29
      %p57 = scmp.eq.s32.totalorder %s56, 0
      %s59 = sadd.s32 %s58, 1
      %s60 = scalar_select %p57, %s58, %s59
      %p63 = pneg %p57
      %p64 = scmp.eq.s32.totalorder %s22, 3
      %p65 = por %p63, %p64
      %p66 = scmp.ne.s32.totalorder %s58, %s61
      %p67 = scmp.eq.s32.totalorder %s22, 0
      %p68 = por %p66, %p67
      %p69 = scmp.ne.s32.totalorder %s58, %s61
      %p70 = scmp.eq.s32.totalorder %s27, 3
      %p71 = por %p69, %p70
      %p72 = scmp.ne.s32.totalorder %s61, %s62
      %p73 = scmp.eq.s32.totalorder %s27, 0
      %p74 = por %p72, %p73
      %p75 = scmp.ne.s32.totalorder %s61, %s62
      %p76 = scmp.eq.s32.totalorder %s28, 3
      %p77 = por %p75, %p76
      %p79 = scmp.ne.s32.totalorder %s62, %s78
      %p80 = scmp.eq.s32.totalorder %s28, 0
      %p81 = por %p79, %p80
      %s83 = sadd.s32 %s82, 1
      %p86 = scmp.eq.s32.totalorder %s22, 3
      %p87 = scmp.ne.s32.totalorder %s82, %s84
      %p88 = scmp.eq.s32.totalorder %s22, 0
      %p89 = por %p87, %p88
      %p90 = scmp.ne.s32.totalorder %s82, %s84
      %p91 = scmp.eq.s32.totalorder %s27, 3
      %p92 = por %p90, %p91
      %p93 = scmp.ne.s32.totalorder %s84, %s85
      %p94 = scmp.eq.s32.totalorder %s27, 0
      %p95 = por %p93, %p94
      %p96 = scmp.ne.s32.totalorder %s84, %s85
      %p97 = scmp.eq.s32.totalorder %s28, 3
      %p98 = por %p96, %p97
      %p100 = scmp.ne.s32.totalorder %s85, %s99
      %p101 = scmp.eq.s32.totalorder %s28, 0
      %p102 = por %p100, %p101
      %s104 = sadd.s32 %s103, 1
      %p107 = scmp.eq.s32.totalorder %s22, 3
      %p108 = scmp.ne.s32.totalorder %s103, %s105
      %p109 = scmp.eq.s32.totalorder %s22, 0
      %p110 = por %p108, %p109
      %p111 = scmp.ne.s32.totalorder %s103, %s105
      %p112 = scmp.eq.s32.totalorder %s27, 3
      %p113 = por %p111, %p112
      %p114 = scmp.ne.s32.totalorder %s105, %s106
      %p115 = scmp.eq.s32.totalorder %s27, 0
      %p116 = por %p114, %p115
      %p117 = scmp.ne.s32.totalorder %s105, %s106
      %p118 = scmp.eq.s32.totalorder %s28, 3
      %p119 = por %p117, %p118
      %p121 = scmp.ne.s32.totalorder %s106, %s120
      %p122 = scmp.eq.s32.totalorder %s28, 0
      %p123 = por %p121, %p122
      %s125 = sadd.s32 %s124, 1
      %p128 = scmp.eq.s32.totalorder %s22, 3
      %p129 = scmp.ne.s32.totalorder %s124, %s126
      %p130 = scmp.eq.s32.totalorder %s22, 0
      %p131 = por %p129, %p130
      %p132 = scmp.ne.s32.totalorder %s124, %s126
      %p133 = scmp.eq.s32.totalorder %s27, 3
      %p134 = por %p132, %p133
      %p135 = scmp.ne.s32.totalorder %s126, %s127
      %p136 = scmp.eq.s32.totalorder %s27, 0
      %p137 = por %p135, %p136
      %p138 = scmp.ne.s32.totalorder %s126, %s127
      %p139 = scmp.eq.s32.totalorder %s28, 3
      %p140 = por %p138, %p139
      %p142 = scmp.ne.s32.totalorder %s127, %s141
      %p143 = scmp.eq.s32.totalorder %s28, 0
      %p144 = por %p142, %p143
      %s146 = sadd.s32 %s145, 1
      %p149 = scmp.eq.s32.totalorder %s22, 3
      %p150 = scmp.ne.s32.totalorder %s145, %s147
      %p151 = scmp.eq.s32.totalorder %s22, 0
      %p152 = por %p150, %p151
      %p153 = scmp.ne.s32.totalorder %s145, %s147
      %p154 = scmp.eq.s32.totalorder %s27, 3
      %p155 = por %p153, %p154
      %p156 = scmp.ne.s32.totalorder %s147, %s148
      %p157 = scmp.eq.s32.totalorder %s27, 0
      %p158 = por %p156, %p157
      %p159 = scmp.ne.s32.totalorder %s147, %s148
      %p160 = scmp.eq.s32.totalorder %s28, 3
      %p161 = por %p159, %p160
      %p163 = scmp.ne.s32.totalorder %s148, %s162
      %p164 = scmp.eq.s32.totalorder %s28, 0
      %p165 = por %p163, %p164
      %s166 = ssub.s32 %s22, %s29
      %p167 = scmp.eq.s32.totalorder %s166, 0
      %s169 = sadd.s32 %s168, 1
      %s170 = scalar_select %p167, %s168, %s169
      %p173 = pneg %p167
      %p174 = scmp.eq.s32.totalorder %s22, 3
      %p175 = por %p173, %p174
      %p176 = scmp.ne.s32.totalorder %s168, %s171
      %p177 = scmp.eq.s32.totalorder %s22, 0
      %p178 = por %p176, %p177
      %p179 = scmp.ne.s32.totalorder %s168, %s171
      %p180 = scmp.eq.s32.totalorder %s27, 3
      %p181 = por %p179, %p180
      %p182 = scmp.ne.s32.totalorder %s171, %s172
      %p183 = scmp.eq.s32.totalorder %s27, 0
      %p184 = por %p182, %p183
      %p185 = scmp.ne.s32.totalorder %s171, %s172
      %p186 = scmp.eq.s32.totalorder %s28, 3
      %p187 = por %p185, %p186
      %p189 = scmp.ne.s32.totalorder %s172, %s188
      %p190 = scmp.eq.s32.totalorder %s28, 0
      %p191 = por %p189, %p190
      %p192 = scmp.le.s32.totalorder 1, %s22
      %p193 = scmp.lt.s32.totalorder %s22, 5
      %p194 = pnand %p192, %p193
      %p195 = pneg %p194
      // Predicated region
      $region9: #{gin_forward.1} parent=5 // pred_check
        _
      $region10: #{gin_forward.1} parent=5 // pred_check_branch
        %197 = sbr.rel (%p194) target = $region12
      $region11: #{gin_forward.1} parent=5 // pred_region
        %s198 = ssub.s32 %s22, 1
        // Predicated region
        $region13: #{gin_forward.1} parent=11 // pred_check
          %p199 = pneg %p95
        $region14: #{gin_forward.1} parent=11 // pred_check_branch
          %201 = sbr.rel (%p199) target = $region16
        $region15: #{gin_forward.1} parent=11 // pred_region
          %s203 = ssub.s32 8192, 8192
          %204 = vsyncadd [#allocation6], %s203
          %s205 = sshll.u32 [#allocation7], 4
          %s206 = int_to_ptr.vmem [resolvable:$true] %s205
          %211 = dma.hbm_to_vmem [thread:$0]  %s2, 8192, %s206, [#allocation6], 64, 64, 4
        $region16: #{gin_forward.1} parent=11 // pred_fallthru
          _
        // Predicated region
        $region17: #{gin_forward.1} parent=11 // pred_check
          %p212 = pneg %p116
        $region18: #{gin_forward.1} parent=11 // pred_check_branch
          %214 = sbr.rel (%p212) target = $region20
        $region19: #{gin_forward.1} parent=11 // pred_region
          %s216 = ssub.s32 128, 128
          %217 = vsyncadd [#allocation9], %s216
          %s219 = sshll.u32 [#allocation8], 4
          %s220 = int_to_ptr.vmem [resolvable:$true] %s219
          %222 = dma.hbm_to_vmem [thread:$0]  %s3, 128, %s220, [#allocation9]
        $region20: #{gin_forward.1} parent=11 // pred_fallthru
          _
        // Predicated region
        $region21: #{gin_forward.1} parent=11 // pred_check
          %p223 = pneg %p137
        $region22: #{gin_forward.1} parent=11 // pred_check_branch
          %225 = sbr.rel (%p223) target = $region24
        $region23: #{gin_forward.1} parent=11 // pred_region
          %s227 = ssub.s32 3072, 3072
          %228 = vsyncadd [#allocation9], %s227
          %s229 = sshll.u32 [#allocation10], 4
          %s230 = int_to_ptr.vmem [resolvable:$true] %s229
          %235 = dma.hbm_to_vmem [thread:$0]  %s4, 3072, %s230, [#allocation9], 64, 64, 4
        $region24: #{gin_forward.1} parent=11 // pred_fallthru
          _
        // Predicated region
        $region25: #{gin_forward.1} parent=11 // pred_check
          %p236 = pneg %p158
        $region26: #{gin_forward.1} parent=11 // pred_check_branch
          %238 = sbr.rel (%p236) target = $region28
        $region27: #{gin_forward.1} parent=11 // pred_region
          _
        $region28: #{gin_forward.1} parent=11 // pred_fallthru
          _
      $region12: #{gin_forward.1} parent=5 // pred_fallthru
        _
      %p239 = scmp.lt.s32.totalorder %s22, 4
      // Predicated region
      $region29: #{gin_forward.1} parent=5 // pred_check
        %p240 = pneg %p239
      $region30: #{gin_forward.1} parent=5 // pred_check_branch
        %242 = sbr.rel (%p240) target = $region32
      $region31: #{gin_forward.1} parent=5 // pred_region
        // Predicated region
        $region33: #{gin_forward.1} parent=31 // pred_check
          %p243 = pneg %p42
        $region34: #{gin_forward.1} parent=31 // pred_check_branch
          %245 = sbr.rel (%p243) target = $region36
        $region35: #{gin_forward.1} parent=31 // pred_region
          %s246 = sand.u32 %s32, 1
          %s247 = scalar_lea.sflag [#allocation3], %s246
          %s248 = sand.u32 %s32, 1
          %s249 = smul.addr %s248, 16
          %s250 = scalar_lea.vmem [#allocation2], %s249
          %s252 = ssub.s32 256, 256
          %253 = vsyncadd %s247, %s252
          %s254 = smul.addr %s22, 4
          %s255 = smul.addr %s254, 64
          %s256 = scalar_lea.hbm %s0, %s255
          %s257 = sshll.u32 %s250, 4
          %s258 = int_to_ptr.vmem [resolvable:$true] %s257
          %263 = dma.hbm_to_vmem [thread:$0]  %s256, 256, %s258, %s247, 64, 64, 4
        $region36: #{gin_forward.1} parent=31 // pred_fallthru
          _
        // Predicated region
        $region37: #{gin_forward.1} parent=31 // pred_check
          %p264 = pneg %p68
        $region38: #{gin_forward.1} parent=31 // pred_check_branch
          %266 = sbr.rel (%p264) target = $region40
        $region39: #{gin_forward.1} parent=31 // pred_region
          %s267 = sand.u32 %s22, 1
          %s268 = scalar_lea.sflag [#allocation6], %s267
          %s269 = sand.u32 %s58, 1
          %s270 = smul.addr %s269, 16
          %s271 = scalar_lea.vmem [#allocation5], %s270
          %s273 = ssub.s32 256, 256
          %274 = vsyncadd %s268, %s273
          %s275 = smul.addr %s22, 4
          %s276 = smul.addr %s275, 64
          %s277 = scalar_lea.hbm %s1, %s276
          %s278 = sshll.u32 %s271, 4
          %s279 = int_to_ptr.vmem [resolvable:$true] %s278
          %284 = dma.hbm_to_vmem [thread:$0]  %s277, 256, %s279, %s268, 64, 64, 4
        $region40: #{gin_forward.1} parent=31 // pred_fallthru
          _
      $region32: #{gin_forward.1} parent=5 // pred_fallthru
        _
      %p285 = scmp.le.s32.totalorder 1, %s22
      %p286 = scmp.lt.s32.totalorder %s22, 5
      %p287 = pnand %p285, %p286
      %p288 = pneg %p287
      // Predicated region
      $region41: #{gin_forward.1} parent=5 // pred_check
        _
      $region42: #{gin_forward.1} parent=5 // pred_check_branch
        %290 = sbr.rel (%p287) target = $region44
      $region43: #{gin_forward.1} parent=5 // pred_region
        %s291 = ssub.s32 %s22, 1
        %s292 = sand.u32 %s35, 1
        %s293 = scalar_lea.sflag [#allocation3], %s292
        %s294 = sand.u32 %s35, 1
        %s295 = smul.addr %s294, 16
        %s296 = scalar_lea.vmem [#allocation2], %s295
        // Predicated region
        $region45: #{gin_forward.1} parent=43 // pred_check
          %p297 = pneg %p48
        $region46: #{gin_forward.1} parent=43 // pred_check_branch
          %299 = sbr.rel (%p297) target = $region48
        $region47: #{gin_forward.1} parent=43 // pred_region
          %300 = dma.done %s293, 256
        $region48: #{gin_forward.1} parent=43 // pred_fallthru
          _
        %s301 = sand.u32 %s27, 1
        %s302 = scalar_lea.sflag [#allocation6], %s301
        %s303 = sand.u32 %s61, 1
        %s304 = smul.addr %s303, 16
        %s305 = scalar_lea.vmem [#allocation5], %s304
        // Predicated region
        $region49: #{gin_forward.1} parent=43 // pred_check
          %p306 = pneg %p74
        $region50: #{gin_forward.1} parent=43 // pred_check_branch
          %308 = sbr.rel (%p306) target = $region52
        $region51: #{gin_forward.1} parent=43 // pred_region
          %309 = dma.done %s302, 256
        $region52: #{gin_forward.1} parent=43 // pred_fallthru
          _
        // Predicated region
        $region53: #{gin_forward.1} parent=43 // pred_check
          %p310 = pneg %p95
        $region54: #{gin_forward.1} parent=43 // pred_check_branch
          %312 = sbr.rel (%p310) target = $region56
        $region55: #{gin_forward.1} parent=43 // pred_region
          %313 = dma.done [#allocation6], 8192
        $region56: #{gin_forward.1} parent=43 // pred_fallthru
          _
        // Predicated region
        $region57: #{gin_forward.1} parent=43 // pred_check
          %p314 = pneg %p116
        $region58: #{gin_forward.1} parent=43 // pred_check_branch
          %316 = sbr.rel (%p314) target = $region60
        $region59: #{gin_forward.1} parent=43 // pred_region
          %317 = dma.done [#allocation9], 128
        $region60: #{gin_forward.1} parent=43 // pred_fallthru
          _
        // Predicated region
        $region61: #{gin_forward.1} parent=43 // pred_check
          %p318 = pneg %p137
        $region62: #{gin_forward.1} parent=43 // pred_check_branch
          %320 = sbr.rel (%p318) target = $region64
        $region63: #{gin_forward.1} parent=43 // pred_region
          %321 = dma.done [#allocation9], 3072
        $region64: #{gin_forward.1} parent=43 // pred_fallthru
          _
        %s322 = sand.u32 %s35, 1
        %s323 = scalar_lea.sflag [#allocation3], %s322
        %s324 = sand.u32 %s35, 1
        %s325 = smul.addr %s324, 16
        %s326 = scalar_lea.vmem [#allocation2], %s325
        %p327 = pneg %p48
        %p328 = pneg %p45
        %s329 = sand.u32 %s27, 1
        %s330 = scalar_lea.sflag [#allocation6], %s329
        %s331 = sand.u32 %s61, 1
        %s332 = smul.addr %s331, 16
        %s333 = scalar_lea.vmem [#allocation5], %s332
        %p334 = pneg %p74
        %p335 = pneg %p71
        %p336 = pneg %p95
        %p337 = pneg %p92
        %p338 = pneg %p116
        %p339 = pneg %p113
        %p340 = pneg %p137
        %p341 = pneg %p134
        %p342 = pneg %p158
        %p343 = pneg %p155
        %p344 = pneg %p184
        %p345 = pneg %p181
        %s346 = sand.u32 %s171, 1
        %s347 = scalar_lea.sflag [#allocation4], %s346
        %s348 = sand.u32 %s171, 1
        %s349 = scalar_lea.vmem [#allocation11], %s348
        %v351 = vld [vmem:[%s296] sm:$0xf]
        %v352 = vld [vmem:[%s296 + $0x4] sm:$0xf]
        %v353 = vld [vmem:[%s296 + $0x8] sm:$0xf]
        %v354 = vld [vmem:[%s296 + $0xc] sm:$0xf]
        %v355 = vld [vmem:[%s305] sm:$0xf]
        %v356 = vld [vmem:[%s305 + $0x4] sm:$0xf]
        %v357 = vld [vmem:[%s305 + $0x8] sm:$0xf]
        %v358 = vld [vmem:[%s305 + $0xc] sm:$0xf]
        %v359 = vunpack.c.l.bf16 %v355
        %v360 = vunpack.c.l.bf16 %v356
        %v361 = vunpack.c.l.bf16 %v357
        %v362 = vunpack.c.l.bf16 %v358
        %v363 = vld [vmem:[#allocation8] sm:$0xff]
        %v364 = vadd.f32 %v359, %v360
        %v365 = vadd.f32 %v364, %v361
        %v366 = vadd.f32 %v365, %v362
        %v367 = vrot.slane %v366, 4
        %v368 = vadd.f32 %v366, %v367
        %v369 = vrot.slane %v368, 2
        %v370 = vadd.f32 %v368, %v369
        %v371 = vrot.slane %v370, 1
        %v372 = vadd.f32 %v370, %v371
        %v377 = vunpack.c.l.b16 %v351
        %v378 = vunpack.c.l.b16 %v352
        %v379 = vunpack.c.l.b16 %v353
        %v380 = vunpack.c.l.b16 %v354
        %v381 = vpack.c.b16 %v378, %v377
        %v382 = vpack.c.b16 %v380, %v379
        %v387 = vunpack.c.l.b16 %v355
        %v388 = vunpack.c.l.b16 %v356
        %v389 = vunpack.c.l.b16 %v357
        %v390 = vunpack.c.l.b16 %v358
        %v391 = vpack.c.b16 %v388, %v387
        %v392 = vpack.c.b16 %v390, %v389
        %vm395 = vcmask 261120
        %v397 = vsel %vm395, %v381, 0
        %v400 = vsel %vm395, %v382, 0
        %402 = vmatprep.subr.bf16.mxu0 0
        %403 = vmatpush1.bf16.msra.mxu0 0
        %404 = vmatprep.subr.bf16.mxu0 0
        %405 = vmatpush1.bf16.msra.mxu0 0
        %406 = vmatprep.subr.bf16.mxu0 0
        %407 = vmatpush1.bf16.msra.mxu0 0
        %408 = vmatprep.subr.bf16.mxu0 0
        %409 = vmatpush1.bf16.msra.mxu0 0
        %410 = vmatprep.subr.bf16.mxu0 0
        %411 = vmatpush1.bf16.msra.mxu0 0
        %412 = vmatprep.subr.bf16.mxu0 0
        %413 = vmatpush1.bf16.msra.mxu0 0
        %414 = vmatprep.subr.bf16.mxu0 0
        %415 = vmatpush1.bf16.msra.mxu0 %v392
        %416 = vmatprep.subr.bf16.mxu0 0
        %417 = vmatpush1.bf16.msra.mxu0 %v391
        %418 = vmatprep.subr.bf16.mxu0 0
        %419 = vmatpush2.bf16.msra.mxu0 0
        %420 = vmatprep.subr.bf16.mxu0 0
        %421 = vmatpush2.bf16.msra.mxu0 0
        %422 = vmatprep.subr.bf16.mxu0 0
        %423 = vmatpush2.bf16.msra.mxu0 0
        %424 = vmatprep.subr.bf16.mxu0 0
        %425 = vmatpush2.bf16.msra.mxu0 0
        %426 = vmatprep.subr.bf16.mxu0 0
        %427 = vmatpush2.bf16.msra.mxu0 0
        %428 = vmatprep.subr.bf16.mxu0 0
        %429 = vmatpush2.bf16.msra.mxu0 0
        %430 = vmatprep.subr.bf16.mxu0 0
        %431 = vmatpush2.bf16.msra.mxu0 0
        %432 = vmatprep.subr.bf16.mxu0 0
        %433 = vmatpush2.bf16.msra.mxu0 0
        %434 = vmatprep.mubr.bf16.mxu0 0
        %435 = vmatmul.mubr.bf16.gmra.mxu0 %v397
        %v436 = vpop.f32.mrf.mxu0
        %v437 = vadd.f32 0.0, %v436
        %v438 = vpop.f32.mrf.mxu0
        %v439 = vpop.f32.mrf.mxu0
        %v440 = vadd.f32 0.0, %v439
        %v441 = vpop.f32.mrf.mxu0
        %442 = vmatprep.mubr.bf16.mxu0 0
        %443 = vmatmul.mubr.bf16.gmra.mxu0 %v400
        %v444 = vpop.f32.mrf.mxu0
        %v445 = vadd.f32 0.0, %v444
        %v446 = vpop.f32.mrf.mxu0
        %v447 = vpop.f32.mrf.mxu0
        %v448 = vadd.f32 0.0, %v447
        %v449 = vpop.f32.mrf.mxu0
        %450 = vdwg.mxu0
        %v451 = vpack.c.bf16 %v440, %v437
        %v452 = vpack.c.bf16 %v448, %v445
        %v453 = vld [vmem:[#allocation7] sm:$0xf]
        %v454 = vld [vmem:[#allocation7 + $0x4] sm:$0xf]
        %v455 = vld [vmem:[#allocation7 + $0x8] sm:$0xf]
        %v456 = vld [vmem:[#allocation7 + $0xc] sm:$0xf]
        %v457 = vld [vmem:[#allocation7 + $0x10] sm:$0xf]
        %v458 = vld [vmem:[#allocation7 + $0x14] sm:$0xf]
        %v459 = vld [vmem:[#allocation7 + $0x18] sm:$0xf]
        %v460 = vld [vmem:[#allocation7 + $0x1c] sm:$0xf]
        %v461 = vld [vmem:[#allocation7 + $0x20] sm:$0xf]
        %v462 = vld [vmem:[#allocation7 + $0x24] sm:$0xf]
        %v463 = vld [vmem:[#allocation7 + $0x28] sm:$0xf]
        %v464 = vld [vmem:[#allocation7 + $0x2c] sm:$0xf]
        %v465 = vld [vmem:[#allocation7 + $0x30] sm:$0xf]
        %v466 = vld [vmem:[#allocation7 + $0x34] sm:$0xf]
        %v467 = vld [vmem:[#allocation7 + $0x38] sm:$0xf]
        %v468 = vld [vmem:[#allocation7 + $0x3c] sm:$0xf]
        %v469 = vlaneseq
        %v470 = vshrl.u32 %v469, 7
        %v471 = vsub.s32 0, %v470
        %v472 = vrot.slane %v363, %v471
        %v489 = vunpack.c.l.b16 %v453
        %v490 = vunpack.c.l.b16 %v454
        %v491 = vunpack.c.l.b16 %v455
        %v492 = vunpack.c.l.b16 %v456
        %v493 = vunpack.c.l.b16 %v457
        %v494 = vunpack.c.l.b16 %v458
        %v495 = vunpack.c.l.b16 %v459
        %v496 = vunpack.c.l.b16 %v460
        %v497 = vunpack.c.l.b16 %v461
        %v498 = vunpack.c.l.b16 %v462
        %v499 = vunpack.c.l.b16 %v463
        %v500 = vunpack.c.l.b16 %v464
        %v501 = vunpack.c.l.b16 %v465
        %v502 = vunpack.c.l.b16 %v466
        %v503 = vunpack.c.l.b16 %v467
        %v504 = vunpack.c.l.b16 %v468
        %v505 = vpack.c.b16 %v490, %v489
        %v506 = vpack.c.b16 %v492, %v491
        %v507 = vpack.c.b16 %v494, %v493
        %v508 = vpack.c.b16 %v496, %v495
        %v509 = vpack.c.b16 %v498, %v497
        %v510 = vpack.c.b16 %v500, %v499
        %v511 = vpack.c.b16 %v502, %v501
        %v512 = vpack.c.b16 %v504, %v503
        %521 = vmatprep.subr.bf16.mxu0 0
        %522 = vmatpush1.bf16.msra.mxu0 %v512
        %523 = vmatprep.subr.bf16.mxu0 0
        %524 = vmatpush1.bf16.msra.mxu0 %v511
        %525 = vmatprep.subr.bf16.mxu0 0
        %526 = vmatpush1.bf16.msra.mxu0 %v510
        %527 = vmatprep.subr.bf16.mxu0 0
        %528 = vmatpush1.bf16.msra.mxu0 %v509
        %529 = vmatprep.subr.bf16.mxu0 0
        %530 = vmatpush1.bf16.msra.mxu0 %v508
        %531 = vmatprep.subr.bf16.mxu0 0
        %532 = vmatpush1.bf16.msra.mxu0 %v507
        %533 = vmatprep.subr.bf16.mxu0 0
        %534 = vmatpush1.bf16.msra.mxu0 %v506
        %535 = vmatprep.subr.bf16.mxu0 0
        %536 = vmatpush1.bf16.msra.mxu0 %v505
        %537 = vmatprep.subr.bf16.mxu0 0
        %538 = vmatpush2.bf16.msra.mxu0 0
        %539 = vmatprep.subr.bf16.mxu0 0
        %540 = vmatpush2.bf16.msra.mxu0 0
        %541 = vmatprep.subr.bf16.mxu0 0
        %542 = vmatpush2.bf16.msra.mxu0 0
        %543 = vmatprep.subr.bf16.mxu0 0
        %544 = vmatpush2.bf16.msra.mxu0 0
        %545 = vmatprep.subr.bf16.mxu0 0
        %546 = vmatpush2.bf16.msra.mxu0 0
        %547 = vmatprep.subr.bf16.mxu0 0
        %548 = vmatpush2.bf16.msra.mxu0 0
        %549 = vmatprep.subr.bf16.mxu0 0
        %550 = vmatpush2.bf16.msra.mxu0 0
        %551 = vmatprep.subr.bf16.mxu0 0
        %552 = vmatpush2.bf16.msra.mxu0 0
        %553 = vmatprep.mubr.bf16.mxu0 0
        %554 = vmatmul.mubr.bf16.gmra.mxu0 %v451
        %v555 = vpop.f32.mrf.mxu0
        %v556 = vadd.f32 %v472, %v555
        %v557 = vpop.f32.mrf.mxu0
        %v558 = vpop.f32.mrf.mxu0
        %v559 = vadd.f32 %v472, %v558
        %v560 = vpop.f32.mrf.mxu0
        %561 = vmatprep.mubr.bf16.mxu0 0
        %562 = vmatmul.mubr.bf16.gmra.mxu0 %v452
        %v563 = vpop.f32.mrf.mxu0
        %v564 = vadd.f32 %v472, %v563
        %v565 = vpop.f32.mrf.mxu0
        %v566 = vpop.f32.mrf.mxu0
        %v567 = vadd.f32 %v472, %v566
        %v568 = vpop.f32.mrf.mxu0
        %569 = vdwg.mxu0
        %v570 = vmax.f32 %v556, 0.0
        %v571 = vmax.f32 %v559, 0.0
        %v572 = vmax.f32 %v564, 0.0
        %v573 = vmax.f32 %v567, 0.0
        %v574 = vpack.c.bf16 %v571, %v570
        %v575 = vpack.c.bf16 %v573, %v572
        %s576 = scalar_lea.vmem [#allocation7], 64
        %v577 = vld [vmem:[%s576] sm:$0xf]
        %v578 = vld [vmem:[%s576 + $0x4] sm:$0xf]
        %v579 = vld [vmem:[%s576 + $0x8] sm:$0xf]
        %v580 = vld [vmem:[%s576 + $0xc] sm:$0xf]
        %v581 = vld [vmem:[%s576 + $0x10] sm:$0xf]
        %v582 = vld [vmem:[%s576 + $0x14] sm:$0xf]
        %v583 = vld [vmem:[%s576 + $0x18] sm:$0xf]
        %v584 = vld [vmem:[%s576 + $0x1c] sm:$0xf]
        %v585 = vld [vmem:[%s576 + $0x20] sm:$0xf]
        %v586 = vld [vmem:[%s576 + $0x24] sm:$0xf]
        %v587 = vld [vmem:[%s576 + $0x28] sm:$0xf]
        %v588 = vld [vmem:[%s576 + $0x2c] sm:$0xf]
        %v589 = vld [vmem:[%s576 + $0x30] sm:$0xf]
        %v590 = vld [vmem:[%s576 + $0x34] sm:$0xf]
        %v591 = vld [vmem:[%s576 + $0x38] sm:$0xf]
        %v592 = vld [vmem:[%s576 + $0x3c] sm:$0xf]
        %v593 = vlaneseq
        %v594 = vshrl.u32 %v593, 7
        %v595 = vsub.s32 1, %v594
        %v596 = vrot.slane %v363, %v595
        %v613 = vunpack.c.l.b16 %v577
        %v614 = vunpack.c.l.b16 %v578
        %v615 = vunpack.c.l.b16 %v579
        %v616 = vunpack.c.l.b16 %v580
        %v617 = vunpack.c.l.b16 %v581
        %v618 = vunpack.c.l.b16 %v582
        %v619 = vunpack.c.l.b16 %v583
        %v620 = vunpack.c.l.b16 %v584
        %v621 = vunpack.c.l.b16 %v585
        %v622 = vunpack.c.l.b16 %v586
        %v623 = vunpack.c.l.b16 %v587
        %v624 = vunpack.c.l.b16 %v588
        %v625 = vunpack.c.l.b16 %v589
        %v626 = vunpack.c.l.b16 %v590
        %v627 = vunpack.c.l.b16 %v591
        %v628 = vunpack.c.l.b16 %v592
        %v629 = vpack.c.b16 %v614, %v613
        %v630 = vpack.c.b16 %v616, %v615
        %v631 = vpack.c.b16 %v618, %v617
        %v632 = vpack.c.b16 %v620, %v619
        %v633 = vpack.c.b16 %v622, %v621
        %v634 = vpack.c.b16 %v624, %v623
        %v635 = vpack.c.b16 %v626, %v625
        %v636 = vpack.c.b16 %v628, %v627
        %645 = vmatprep.subr.bf16.mxu0 0
        %646 = vmatpush1.bf16.msra.mxu0 %v636
        %647 = vmatprep.subr.bf16.mxu0 0
        %648 = vmatpush1.bf16.msra.mxu0 %v635
        %649 = vmatprep.subr.bf16.mxu0 0
        %650 = vmatpush1.bf16.msra.mxu0 %v634
        %651 = vmatprep.subr.bf16.mxu0 0
        %652 = vmatpush1.bf16.msra.mxu0 %v633
        %653 = vmatprep.subr.bf16.mxu0 0
        %654 = vmatpush1.bf16.msra.mxu0 %v632
        %655 = vmatprep.subr.bf16.mxu0 0
        %656 = vmatpush1.bf16.msra.mxu0 %v631
        %657 = vmatprep.subr.bf16.mxu0 0
        %658 = vmatpush1.bf16.msra.mxu0 %v630
        %659 = vmatprep.subr.bf16.mxu0 0
        %660 = vmatpush1.bf16.msra.mxu0 %v629
        %661 = vmatprep.subr.bf16.mxu0 0
        %662 = vmatpush2.bf16.msra.mxu0 0
        %663 = vmatprep.subr.bf16.mxu0 0
        %664 = vmatpush2.bf16.msra.mxu0 0
        %665 = vmatprep.subr.bf16.mxu0 0
        %666 = vmatpush2.bf16.msra.mxu0 0
        %667 = vmatprep.subr.bf16.mxu0 0
        %668 = vmatpush2.bf16.msra.mxu0 0
        %669 = vmatprep.subr.bf16.mxu0 0
        %670 = vmatpush2.bf16.msra.mxu0 0
        %671 = vmatprep.subr.bf16.mxu0 0
        %672 = vmatpush2.bf16.msra.mxu0 0
        %673 = vmatprep.subr.bf16.mxu0 0
        %674 = vmatpush2.bf16.msra.mxu0 0
        %675 = vmatprep.subr.bf16.mxu0 0
        %676 = vmatpush2.bf16.msra.mxu0 0
        %677 = vmatprep.mubr.bf16.mxu0 0
        %678 = vmatmul.mubr.bf16.gmra.mxu0 %v574
        %v679 = vpop.f32.mrf.mxu0
        %v680 = vadd.f32 %v596, %v679
        %v681 = vpop.f32.mrf.mxu0
        %v682 = vpop.f32.mrf.mxu0
        %v683 = vadd.f32 %v596, %v682
        %v684 = vpop.f32.mrf.mxu0
        %685 = vmatprep.mubr.bf16.mxu0 0
        %686 = vmatmul.mubr.bf16.gmra.mxu0 %v575
        %v687 = vpop.f32.mrf.mxu0
        %v688 = vadd.f32 %v596, %v687
        %v689 = vpop.f32.mrf.mxu0
        %v690 = vpop.f32.mrf.mxu0
        %v691 = vadd.f32 %v596, %v690
        %v692 = vpop.f32.mrf.mxu0
        %693 = vdwg.mxu0
        %v694 = vadd.f32 %v680, %v359
        %v695 = vadd.f32 %v683, %v360
        %v696 = vadd.f32 %v688, %v361
        %v697 = vadd.f32 %v691, %v362
        %v698 = vpack.c.bf16 %v695, %v694
        %v699 = vpack.c.bf16 %v697, %v696
        %s700 = scalar_lea.vmem [#allocation7], 128
        %v701 = vld [vmem:[%s700] sm:$0xf]
        %v702 = vld [vmem:[%s700 + $0x4] sm:$0xf]
        %v703 = vld [vmem:[%s700 + $0x8] sm:$0xf]
        %v704 = vld [vmem:[%s700 + $0xc] sm:$0xf]
        %v705 = vld [vmem:[%s700 + $0x10] sm:$0xf]
        %v706 = vld [vmem:[%s700 + $0x14] sm:$0xf]
        %v707 = vld [vmem:[%s700 + $0x18] sm:$0xf]
        %v708 = vld [vmem:[%s700 + $0x1c] sm:$0xf]
        %v709 = vld [vmem:[%s700 + $0x20] sm:$0xf]
        %v710 = vld [vmem:[%s700 + $0x24] sm:$0xf]
        %v711 = vld [vmem:[%s700 + $0x28] sm:$0xf]
        %v712 = vld [vmem:[%s700 + $0x2c] sm:$0xf]
        %v713 = vld [vmem:[%s700 + $0x30] sm:$0xf]
        %v714 = vld [vmem:[%s700 + $0x34] sm:$0xf]
        %v715 = vld [vmem:[%s700 + $0x38] sm:$0xf]
        %v716 = vld [vmem:[%s700 + $0x3c] sm:$0xf]
        %v717 = vlaneseq
        %v718 = vshrl.u32 %v717, 7
        %v719 = vsub.s32 2, %v718
        %v720 = vrot.slane %v363, %v719
        %v737 = vunpack.c.l.b16 %v701
        %v738 = vunpack.c.l.b16 %v702
        %v739 = vunpack.c.l.b16 %v703
        %v740 = vunpack.c.l.b16 %v704
        %v741 = vunpack.c.l.b16 %v705
        %v742 = vunpack.c.l.b16 %v706
        %v743 = vunpack.c.l.b16 %v707
        %v744 = vunpack.c.l.b16 %v708
        %v745 = vunpack.c.l.b16 %v709
        %v746 = vunpack.c.l.b16 %v710
        %v747 = vunpack.c.l.b16 %v711
        %v748 = vunpack.c.l.b16 %v712
        %v749 = vunpack.c.l.b16 %v713
        %v750 = vunpack.c.l.b16 %v714
        %v751 = vunpack.c.l.b16 %v715
        %v752 = vunpack.c.l.b16 %v716
        %v753 = vpack.c.b16 %v738, %v737
        %v754 = vpack.c.b16 %v740, %v739
        %v755 = vpack.c.b16 %v742, %v741
        %v756 = vpack.c.b16 %v744, %v743
        %v757 = vpack.c.b16 %v746, %v745
        %v758 = vpack.c.b16 %v748, %v747
        %v759 = vpack.c.b16 %v750, %v749
        %v760 = vpack.c.b16 %v752, %v751
        %769 = vmatprep.subr.bf16.mxu0 0
        %770 = vmatpush1.bf16.msra.mxu0 %v760
        %771 = vmatprep.subr.bf16.mxu0 0
        %772 = vmatpush1.bf16.msra.mxu0 %v759
        %773 = vmatprep.subr.bf16.mxu0 0
        %774 = vmatpush1.bf16.msra.mxu0 %v758
        %775 = vmatprep.subr.bf16.mxu0 0
        %776 = vmatpush1.bf16.msra.mxu0 %v757
        %777 = vmatprep.subr.bf16.mxu0 0
        %778 = vmatpush1.bf16.msra.mxu0 %v756
        %779 = vmatprep.subr.bf16.mxu0 0
        %780 = vmatpush1.bf16.msra.mxu0 %v755
        %781 = vmatprep.subr.bf16.mxu0 0
        %782 = vmatpush1.bf16.msra.mxu0 %v754
        %783 = vmatprep.subr.bf16.mxu0 0
        %784 = vmatpush1.bf16.msra.mxu0 %v753
        %785 = vmatprep.subr.bf16.mxu0 0
        %786 = vmatpush2.bf16.msra.mxu0 0
        %787 = vmatprep.subr.bf16.mxu0 0
        %788 = vmatpush2.bf16.msra.mxu0 0
        %789 = vmatprep.subr.bf16.mxu0 0
        %790 = vmatpush2.bf16.msra.mxu0 0
        %791 = vmatprep.subr.bf16.mxu0 0
        %792 = vmatpush2.bf16.msra.mxu0 0
        %793 = vmatprep.subr.bf16.mxu0 0
        %794 = vmatpush2.bf16.msra.mxu0 0
        %795 = vmatprep.subr.bf16.mxu0 0
        %796 = vmatpush2.bf16.msra.mxu0 0
        %797 = vmatprep.subr.bf16.mxu0 0
        %798 = vmatpush2.bf16.msra.mxu0 0
        %799 = vmatprep.subr.bf16.mxu0 0
        %800 = vmatpush2.bf16.msra.mxu0 0
        %801 = vmatprep.mubr.bf16.mxu0 0
        %802 = vmatmul.mubr.bf16.gmra.mxu0 %v698
        %v803 = vpop.f32.mrf.mxu0
        %v804 = vadd.f32 %v720, %v803
        %v805 = vpop.f32.mrf.mxu0
        %v806 = vpop.f32.mrf.mxu0
        %v807 = vadd.f32 %v720, %v806
        %v808 = vpop.f32.mrf.mxu0
        %809 = vmatprep.mubr.bf16.mxu0 0
        %810 = vmatmul.mubr.bf16.gmra.mxu0 %v699
        %v811 = vpop.f32.mrf.mxu0
        %v812 = vadd.f32 %v720, %v811
        %v813 = vpop.f32.mrf.mxu0
        %v814 = vpop.f32.mrf.mxu0
        %v815 = vadd.f32 %v720, %v814
        %v816 = vpop.f32.mrf.mxu0
        %817 = vdwg.mxu0
        %v818 = vmax.f32 %v804, 0.0
        %v819 = vmax.f32 %v807, 0.0
        %v820 = vmax.f32 %v812, 0.0
        %v821 = vmax.f32 %v815, 0.0
        %v822 = vpack.c.bf16 %v819, %v818
        %v823 = vpack.c.bf16 %v821, %v820
        %s824 = scalar_lea.vmem [#allocation7], 192
        %v825 = vld [vmem:[%s824] sm:$0xf]
        %v826 = vld [vmem:[%s824 + $0x4] sm:$0xf]
        %v827 = vld [vmem:[%s824 + $0x8] sm:$0xf]
        %v828 = vld [vmem:[%s824 + $0xc] sm:$0xf]
        %v829 = vld [vmem:[%s824 + $0x10] sm:$0xf]
        %v830 = vld [vmem:[%s824 + $0x14] sm:$0xf]
        %v831 = vld [vmem:[%s824 + $0x18] sm:$0xf]
        %v832 = vld [vmem:[%s824 + $0x1c] sm:$0xf]
        %v833 = vld [vmem:[%s824 + $0x20] sm:$0xf]
        %v834 = vld [vmem:[%s824 + $0x24] sm:$0xf]
        %v835 = vld [vmem:[%s824 + $0x28] sm:$0xf]
        %v836 = vld [vmem:[%s824 + $0x2c] sm:$0xf]
        %v837 = vld [vmem:[%s824 + $0x30] sm:$0xf]
        %v838 = vld [vmem:[%s824 + $0x34] sm:$0xf]
        %v839 = vld [vmem:[%s824 + $0x38] sm:$0xf]
        %v840 = vld [vmem:[%s824 + $0x3c] sm:$0xf]
        %v841 = vlaneseq
        %v842 = vshrl.u32 %v841, 7
        %v843 = vsub.s32 3, %v842
        %v844 = vrot.slane %v363, %v843
        %v861 = vunpack.c.l.b16 %v825
        %v862 = vunpack.c.l.b16 %v826
        %v863 = vunpack.c.l.b16 %v827
        %v864 = vunpack.c.l.b16 %v828
        %v865 = vunpack.c.l.b16 %v829
        %v866 = vunpack.c.l.b16 %v830
        %v867 = vunpack.c.l.b16 %v831
        %v868 = vunpack.c.l.b16 %v832
        %v869 = vunpack.c.l.b16 %v833
        %v870 = vunpack.c.l.b16 %v834
        %v871 = vunpack.c.l.b16 %v835
        %v872 = vunpack.c.l.b16 %v836
        %v873 = vunpack.c.l.b16 %v837
        %v874 = vunpack.c.l.b16 %v838
        %v875 = vunpack.c.l.b16 %v839
        %v876 = vunpack.c.l.b16 %v840
        %v877 = vpack.c.b16 %v862, %v861
        %v878 = vpack.c.b16 %v864, %v863
        %v879 = vpack.c.b16 %v866, %v865
        %v880 = vpack.c.b16 %v868, %v867
        %v881 = vpack.c.b16 %v870, %v869
        %v882 = vpack.c.b16 %v872, %v871
        %v883 = vpack.c.b16 %v874, %v873
        %v884 = vpack.c.b16 %v876, %v875
        %893 = vmatprep.subr.bf16.mxu0 0
        %894 = vmatpush1.bf16.msra.mxu0 %v884
        %895 = vmatprep.subr.bf16.mxu0 0
        %896 = vmatpush1.bf16.msra.mxu0 %v883
        %897 = vmatprep.subr.bf16.mxu0 0
        %898 = vmatpush1.bf16.msra.mxu0 %v882
        %899 = vmatprep.subr.bf16.mxu0 0
        %900 = vmatpush1.bf16.msra.mxu0 %v881
        %901 = vmatprep.subr.bf16.mxu0 0
        %902 = vmatpush1.bf16.msra.mxu0 %v880
        %903 = vmatprep.subr.bf16.mxu0 0
        %904 = vmatpush1.bf16.msra.mxu0 %v879
        %905 = vmatprep.subr.bf16.mxu0 0
        %906 = vmatpush1.bf16.msra.mxu0 %v878
        %907 = vmatprep.subr.bf16.mxu0 0
        %908 = vmatpush1.bf16.msra.mxu0 %v877
        %909 = vmatprep.subr.bf16.mxu0 0
        %910 = vmatpush2.bf16.msra.mxu0 0
        %911 = vmatprep.subr.bf16.mxu0 0
        %912 = vmatpush2.bf16.msra.mxu0 0
        %913 = vmatprep.subr.bf16.mxu0 0
        %914 = vmatpush2.bf16.msra.mxu0 0
        %915 = vmatprep.subr.bf16.mxu0 0
        %916 = vmatpush2.bf16.msra.mxu0 0
        %917 = vmatprep.subr.bf16.mxu0 0
        %918 = vmatpush2.bf16.msra.mxu0 0
        %919 = vmatprep.subr.bf16.mxu0 0
        %920 = vmatpush2.bf16.msra.mxu0 0
        %921 = vmatprep.subr.bf16.mxu0 0
        %922 = vmatpush2.bf16.msra.mxu0 0
        %923 = vmatprep.subr.bf16.mxu0 0
        %924 = vmatpush2.bf16.msra.mxu0 0
        %925 = vmatprep.mubr.bf16.mxu0 0
        %926 = vmatmul.mubr.bf16.gmra.mxu0 %v822
        %v927 = vpop.f32.mrf.mxu0
        %v928 = vadd.f32 %v844, %v927
        %v929 = vpop.f32.mrf.mxu0
        %v930 = vpop.f32.mrf.mxu0
        %v931 = vadd.f32 %v844, %v930
        %v932 = vpop.f32.mrf.mxu0
        %933 = vmatprep.mubr.bf16.mxu0 0
        %934 = vmatmul.mubr.bf16.gmra.mxu0 %v823
        %v935 = vpop.f32.mrf.mxu0
        %v936 = vadd.f32 %v844, %v935
        %v937 = vpop.f32.mrf.mxu0
        %v938 = vpop.f32.mrf.mxu0
        %v939 = vadd.f32 %v844, %v938
        %v940 = vpop.f32.mrf.mxu0
        %941 = vdwg.mxu0
        %v942 = vmax.f32 %v928, 0.0
        %v943 = vmax.f32 %v931, 0.0
        %v944 = vmax.f32 %v936, 0.0
        %v945 = vmax.f32 %v939, 0.0
        %v946 = vpack.c.bf16 %v943, %v942
        %v947 = vpack.c.bf16 %v945, %v944
        %v948 = vadd.f32 %v942, %v943
        %v949 = vadd.f32 %v948, %v944
        %v950 = vadd.f32 %v949, %v945
        %v951 = vrot.slane %v950, 4
        %v952 = vadd.f32 %v950, %v951
        %v953 = vrot.slane %v952, 2
        %v954 = vadd.f32 %v952, %v953
        %v955 = vrot.slane %v954, 1
        %v956 = vadd.f32 %v954, %v955
        %957 = vmatprep.subr.bf16.mxu0 0
        %958 = vmatpush1.bf16.msra.mxu0 0
        %959 = vmatprep.subr.bf16.mxu0 0
        %960 = vmatpush1.bf16.msra.mxu0 0
        %961 = vmatprep.subr.bf16.mxu0 0
        %962 = vmatpush1.bf16.msra.mxu0 0
        %963 = vmatprep.subr.bf16.mxu0 0
        %964 = vmatpush1.bf16.msra.mxu0 0
        %965 = vmatprep.subr.bf16.mxu0 0
        %966 = vmatpush1.bf16.msra.mxu0 0
        %967 = vmatprep.subr.bf16.mxu0 0
        %968 = vmatpush1.bf16.msra.mxu0 0
        %969 = vmatprep.subr.bf16.mxu0 0
        %970 = vmatpush1.bf16.msra.mxu0 %v947
        %971 = vmatprep.subr.bf16.mxu0 0
        %972 = vmatpush1.bf16.msra.mxu0 %v946
        %973 = vmatprep.subr.bf16.mxu0 0
        %974 = vmatpush2.bf16.msra.mxu0 0
        %975 = vmatprep.subr.bf16.mxu0 0
        %976 = vmatpush2.bf16.msra.mxu0 0
        %977 = vmatprep.subr.bf16.mxu0 0
        %978 = vmatpush2.bf16.msra.mxu0 0
        %979 = vmatprep.subr.bf16.mxu0 0
        %980 = vmatpush2.bf16.msra.mxu0 0
        %981 = vmatprep.subr.bf16.mxu0 0
        %982 = vmatpush2.bf16.msra.mxu0 0
        %983 = vmatprep.subr.bf16.mxu0 0
        %984 = vmatpush2.bf16.msra.mxu0 0
        %985 = vmatprep.subr.bf16.mxu0 0
        %986 = vmatpush2.bf16.msra.mxu0 0
        %987 = vmatprep.subr.bf16.mxu0 0
        %988 = vmatpush2.bf16.msra.mxu0 0
        %989 = vmatprep.mubr.bf16.mxu0 0
        %990 = vmatmul.mubr.bf16.gmra.mxu0 %v397
        %v991 = vpop.f32.mrf.mxu0
        %v992 = vadd.f32 0.0, %v991
        %v993 = vpop.f32.mrf.mxu0
        %v994 = vpop.f32.mrf.mxu0
        %v995 = vadd.f32 0.0, %v994
        %v996 = vpop.f32.mrf.mxu0
        %997 = vmatprep.mubr.bf16.mxu0 0
        %998 = vmatmul.mubr.bf16.gmra.mxu0 %v400
        %v999 = vpop.f32.mrf.mxu0
        %v1000 = vadd.f32 0.0, %v999
        %v1001 = vpop.f32.mrf.mxu0
        %v1002 = vpop.f32.mrf.mxu0
        %v1003 = vadd.f32 0.0, %v1002
        %v1004 = vpop.f32.mrf.mxu0
        %1005 = vdwg.mxu0
        %v1006 = vpack.c.bf16 %v995, %v992
        %v1007 = vpack.c.bf16 %v1003, %v1000
        %s1008 = scalar_lea.vmem [#allocation7], 256
        %v1009 = vld [vmem:[%s1008] sm:$0xf]
        %v1010 = vld [vmem:[%s1008 + $0x4] sm:$0xf]
        %v1011 = vld [vmem:[%s1008 + $0x8] sm:$0xf]
        %v1012 = vld [vmem:[%s1008 + $0xc] sm:$0xf]
        %v1013 = vld [vmem:[%s1008 + $0x10] sm:$0xf]
        %v1014 = vld [vmem:[%s1008 + $0x14] sm:$0xf]
        %v1015 = vld [vmem:[%s1008 + $0x18] sm:$0xf]
        %v1016 = vld [vmem:[%s1008 + $0x1c] sm:$0xf]
        %v1017 = vld [vmem:[%s1008 + $0x20] sm:$0xf]
        %v1018 = vld [vmem:[%s1008 + $0x24] sm:$0xf]
        %v1019 = vld [vmem:[%s1008 + $0x28] sm:$0xf]
        %v1020 = vld [vmem:[%s1008 + $0x2c] sm:$0xf]
        %v1021 = vld [vmem:[%s1008 + $0x30] sm:$0xf]
        %v1022 = vld [vmem:[%s1008 + $0x34] sm:$0xf]
        %v1023 = vld [vmem:[%s1008 + $0x38] sm:$0xf]
        %v1024 = vld [vmem:[%s1008 + $0x3c] sm:$0xf]
        %v1025 = vlaneseq
        %v1026 = vshrl.u32 %v1025, 7
        %v1027 = vsub.s32 4, %v1026
        %v1028 = vrot.slane %v363, %v1027
        %v1045 = vunpack.c.l.b16 %v1009
        %v1046 = vunpack.c.l.b16 %v1010
        %v1047 = vunpack.c.l.b16 %v1011
        %v1048 = vunpack.c.l.b16 %v1012
        %v1049 = vunpack.c.l.b16 %v1013
        %v1050 = vunpack.c.l.b16 %v1014
        %v1051 = vunpack.c.l.b16 %v1015
        %v1052 = vunpack.c.l.b16 %v1016
        %v1053 = vunpack.c.l.b16 %v1017
        %v1054 = vunpack.c.l.b16 %v1018
        %v1055 = vunpack.c.l.b16 %v1019
        %v1056 = vunpack.c.l.b16 %v1020
        %v1057 = vunpack.c.l.b16 %v1021
        %v1058 = vunpack.c.l.b16 %v1022
        %v1059 = vunpack.c.l.b16 %v1023
        %v1060 = vunpack.c.l.b16 %v1024
        %v1061 = vpack.c.b16 %v1046, %v1045
        %v1062 = vpack.c.b16 %v1048, %v1047
        %v1063 = vpack.c.b16 %v1050, %v1049
        %v1064 = vpack.c.b16 %v1052, %v1051
        %v1065 = vpack.c.b16 %v1054, %v1053
        %v1066 = vpack.c.b16 %v1056, %v1055
        %v1067 = vpack.c.b16 %v1058, %v1057
        %v1068 = vpack.c.b16 %v1060, %v1059
        %1077 = vmatprep.subr.bf16.mxu0 0
        %1078 = vmatpush1.bf16.msra.mxu0 %v1068
        %1079 = vmatprep.subr.bf16.mxu0 0
        %1080 = vmatpush1.bf16.msra.mxu0 %v1067
        %1081 = vmatprep.subr.bf16.mxu0 0
        %1082 = vmatpush1.bf16.msra.mxu0 %v1066
        %1083 = vmatprep.subr.bf16.mxu0 0
        %1084 = vmatpush1.bf16.msra.mxu0 %v1065
        %1085 = vmatprep.subr.bf16.mxu0 0
        %1086 = vmatpush1.bf16.msra.mxu0 %v1064
        %1087 = vmatprep.subr.bf16.mxu0 0
        %1088 = vmatpush1.bf16.msra.mxu0 %v1063
        %1089 = vmatprep.subr.bf16.mxu0 0
        %1090 = vmatpush1.bf16.msra.mxu0 %v1062
        %1091 = vmatprep.subr.bf16.mxu0 0
        %1092 = vmatpush1.bf16.msra.mxu0 %v1061
        %1093 = vmatprep.subr.bf16.mxu0 0
        %1094 = vmatpush2.bf16.msra.mxu0 0
        %1095 = vmatprep.subr.bf16.mxu0 0
        %1096 = vmatpush2.bf16.msra.mxu0 0
        %1097 = vmatprep.subr.bf16.mxu0 0
        %1098 = vmatpush2.bf16.msra.mxu0 0
        %1099 = vmatprep.subr.bf16.mxu0 0
        %1100 = vmatpush2.bf16.msra.mxu0 0
        %1101 = vmatprep.subr.bf16.mxu0 0
        %1102 = vmatpush2.bf16.msra.mxu0 0
        %1103 = vmatprep.subr.bf16.mxu0 0
        %1104 = vmatpush2.bf16.msra.mxu0 0
        %1105 = vmatprep.subr.bf16.mxu0 0
        %1106 = vmatpush2.bf16.msra.mxu0 0
        %1107 = vmatprep.subr.bf16.mxu0 0
        %1108 = vmatpush2.bf16.msra.mxu0 0
        %1109 = vmatprep.mubr.bf16.mxu0 0
        %1110 = vmatmul.mubr.bf16.gmra.mxu0 %v1006
        %v1111 = vpop.f32.mrf.mxu0
        %v1112 = vadd.f32 %v1028, %v1111
        %v1113 = vpop.f32.mrf.mxu0
        %v1114 = vpop.f32.mrf.mxu0
        %v1115 = vadd.f32 %v1028, %v1114
        %v1116 = vpop.f32.mrf.mxu0
        %1117 = vmatprep.mubr.bf16.mxu0 0
        %1118 = vmatmul.mubr.bf16.gmra.mxu0 %v1007
        %v1119 = vpop.f32.mrf.mxu0
        %v1120 = vadd.f32 %v1028, %v1119
        %v1121 = vpop.f32.mrf.mxu0
        %v1122 = vpop.f32.mrf.mxu0
        %v1123 = vadd.f32 %v1028, %v1122
        %v1124 = vpop.f32.mrf.mxu0
        %1125 = vdwg.mxu0
        %v1126 = vmax.f32 %v1112, 0.0
        %v1127 = vmax.f32 %v1115, 0.0
        %v1128 = vmax.f32 %v1120, 0.0
        %v1129 = vmax.f32 %v1123, 0.0
        %v1130 = vpack.c.bf16 %v1127, %v1126
        %v1131 = vpack.c.bf16 %v1129, %v1128
        %s1132 = scalar_lea.vmem [#allocation7], 320
        %v1133 = vld [vmem:[%s1132] sm:$0xf]
        %v1134 = vld [vmem:[%s1132 + $0x4] sm:$0xf]
        %v1135 = vld [vmem:[%s1132 + $0x8] sm:$0xf]
        %v1136 = vld [vmem:[%s1132 + $0xc] sm:$0xf]
        %v1137 = vld [vmem:[%s1132 + $0x10] sm:$0xf]
        %v1138 = vld [vmem:[%s1132 + $0x14] sm:$0xf]
        %v1139 = vld [vmem:[%s1132 + $0x18] sm:$0xf]
        %v1140 = vld [vmem:[%s1132 + $0x1c] sm:$0xf]
        %v1141 = vld [vmem:[%s1132 + $0x20] sm:$0xf]
        %v1142 = vld [vmem:[%s1132 + $0x24] sm:$0xf]
        %v1143 = vld [vmem:[%s1132 + $0x28] sm:$0xf]
        %v1144 = vld [vmem:[%s1132 + $0x2c] sm:$0xf]
        %v1145 = vld [vmem:[%s1132 + $0x30] sm:$0xf]
        %v1146 = vld [vmem:[%s1132 + $0x34] sm:$0xf]
        %v1147 = vld [vmem:[%s1132 + $0x38] sm:$0xf]
        %v1148 = vld [vmem:[%s1132 + $0x3c] sm:$0xf]
        %v1149 = vlaneseq
        %v1150 = vshrl.u32 %v1149, 7
        %v1151 = vsub.s32 5, %v1150
        %v1152 = vrot.slane %v363, %v1151
        %v1169 = vunpack.c.l.b16 %v1133
        %v1170 = vunpack.c.l.b16 %v1134
        %v1171 = vunpack.c.l.b16 %v1135
        %v1172 = vunpack.c.l.b16 %v1136
        %v1173 = vunpack.c.l.b16 %v1137
        %v1174 = vunpack.c.l.b16 %v1138
        %v1175 = vunpack.c.l.b16 %v1139
        %v1176 = vunpack.c.l.b16 %v1140
        %v1177 = vunpack.c.l.b16 %v1141
        %v1178 = vunpack.c.l.b16 %v1142
        %v1179 = vunpack.c.l.b16 %v1143
        %v1180 = vunpack.c.l.b16 %v1144
        %v1181 = vunpack.c.l.b16 %v1145
        %v1182 = vunpack.c.l.b16 %v1146
        %v1183 = vunpack.c.l.b16 %v1147
        %v1184 = vunpack.c.l.b16 %v1148
        %v1185 = vpack.c.b16 %v1170, %v1169
        %v1186 = vpack.c.b16 %v1172, %v1171
        %v1187 = vpack.c.b16 %v1174, %v1173
        %v1188 = vpack.c.b16 %v1176, %v1175
        %v1189 = vpack.c.b16 %v1178, %v1177
        %v1190 = vpack.c.b16 %v1180, %v1179
        %v1191 = vpack.c.b16 %v1182, %v1181
        %v1192 = vpack.c.b16 %v1184, %v1183
        %1201 = vmatprep.subr.bf16.mxu0 0
        %1202 = vmatpush1.bf16.msra.mxu0 %v1192
        %1203 = vmatprep.subr.bf16.mxu0 0
        %1204 = vmatpush1.bf16.msra.mxu0 %v1191
        %1205 = vmatprep.subr.bf16.mxu0 0
        %1206 = vmatpush1.bf16.msra.mxu0 %v1190
        %1207 = vmatprep.subr.bf16.mxu0 0
        %1208 = vmatpush1.bf16.msra.mxu0 %v1189
        %1209 = vmatprep.subr.bf16.mxu0 0
        %1210 = vmatpush1.bf16.msra.mxu0 %v1188
        %1211 = vmatprep.subr.bf16.mxu0 0
        %1212 = vmatpush1.bf16.msra.mxu0 %v1187
        %1213 = vmatprep.subr.bf16.mxu0 0
        %1214 = vmatpush1.bf16.msra.mxu0 %v1186
        %1215 = vmatprep.subr.bf16.mxu0 0
        %1216 = vmatpush1.bf16.msra.mxu0 %v1185
        %1217 = vmatprep.subr.bf16.mxu0 0
        %1218 = vmatpush2.bf16.msra.mxu0 0
        %1219 = vmatprep.subr.bf16.mxu0 0
        %1220 = vmatpush2.bf16.msra.mxu0 0
        %1221 = vmatprep.subr.bf16.mxu0 0
        %1222 = vmatpush2.bf16.msra.mxu0 0
        %1223 = vmatprep.subr.bf16.mxu0 0
        %1224 = vmatpush2.bf16.msra.mxu0 0
        %1225 = vmatprep.subr.bf16.mxu0 0
        %1226 = vmatpush2.bf16.msra.mxu0 0
        %1227 = vmatprep.subr.bf16.mxu0 0
        %1228 = vmatpush2.bf16.msra.mxu0 0
        %1229 = vmatprep.subr.bf16.mxu0 0
        %1230 = vmatpush2.bf16.msra.mxu0 0
        %1231 = vmatprep.subr.bf16.mxu0 0
        %1232 = vmatpush2.bf16.msra.mxu0 0
        %1233 = vmatprep.mubr.bf16.mxu0 0
        %1234 = vmatmul.mubr.bf16.gmra.mxu0 %v1130
        %v1235 = vpop.f32.mrf.mxu0
        %v1236 = vadd.f32 %v1152, %v1235
        %v1237 = vpop.f32.mrf.mxu0
        %v1238 = vpop.f32.mrf.mxu0
        %v1239 = vadd.f32 %v1152, %v1238
        %v1240 = vpop.f32.mrf.mxu0
        %1241 = vmatprep.mubr.bf16.mxu0 0
        %1242 = vmatmul.mubr.bf16.gmra.mxu0 %v1131
        %v1243 = vpop.f32.mrf.mxu0
        %v1244 = vadd.f32 %v1152, %v1243
        %v1245 = vpop.f32.mrf.mxu0
        %v1246 = vpop.f32.mrf.mxu0
        %v1247 = vadd.f32 %v1152, %v1246
        %v1248 = vpop.f32.mrf.mxu0
        %1249 = vdwg.mxu0
        %v1250 = vadd.f32 %v1236, %v942
        %v1251 = vadd.f32 %v1239, %v943
        %v1252 = vadd.f32 %v1244, %v944
        %v1253 = vadd.f32 %v1247, %v945
        %v1254 = vpack.c.bf16 %v1251, %v1250
        %v1255 = vpack.c.bf16 %v1253, %v1252
        %s1256 = scalar_lea.vmem [#allocation7], 384
        %v1257 = vld [vmem:[%s1256] sm:$0xf]
        %v1258 = vld [vmem:[%s1256 + $0x4] sm:$0xf]
        %v1259 = vld [vmem:[%s1256 + $0x8] sm:$0xf]
        %v1260 = vld [vmem:[%s1256 + $0xc] sm:$0xf]
        %v1261 = vld [vmem:[%s1256 + $0x10] sm:$0xf]
        %v1262 = vld [vmem:[%s1256 + $0x14] sm:$0xf]
        %v1263 = vld [vmem:[%s1256 + $0x18] sm:$0xf]
        %v1264 = vld [vmem:[%s1256 + $0x1c] sm:$0xf]
        %v1265 = vld [vmem:[%s1256 + $0x20] sm:$0xf]
        %v1266 = vld [vmem:[%s1256 + $0x24] sm:$0xf]
        %v1267 = vld [vmem:[%s1256 + $0x28] sm:$0xf]
        %v1268 = vld [vmem:[%s1256 + $0x2c] sm:$0xf]
        %v1269 = vld [vmem:[%s1256 + $0x30] sm:$0xf]
        %v1270 = vld [vmem:[%s1256 + $0x34] sm:$0xf]
        %v1271 = vld [vmem:[%s1256 + $0x38] sm:$0xf]
        %v1272 = vld [vmem:[%s1256 + $0x3c] sm:$0xf]
        %v1273 = vlaneseq
        %v1274 = vshrl.u32 %v1273, 7
        %v1275 = vsub.s32 6, %v1274
        %v1276 = vrot.slane %v363, %v1275
        %v1293 = vunpack.c.l.b16 %v1257
        %v1294 = vunpack.c.l.b16 %v1258
        %v1295 = vunpack.c.l.b16 %v1259
        %v1296 = vunpack.c.l.b16 %v1260
        %v1297 = vunpack.c.l.b16 %v1261
        %v1298 = vunpack.c.l.b16 %v1262
        %v1299 = vunpack.c.l.b16 %v1263
        %v1300 = vunpack.c.l.b16 %v1264
        %v1301 = vunpack.c.l.b16 %v1265
        %v1302 = vunpack.c.l.b16 %v1266
        %v1303 = vunpack.c.l.b16 %v1267
        %v1304 = vunpack.c.l.b16 %v1268
        %v1305 = vunpack.c.l.b16 %v1269
        %v1306 = vunpack.c.l.b16 %v1270
        %v1307 = vunpack.c.l.b16 %v1271
        %v1308 = vunpack.c.l.b16 %v1272
        %v1309 = vpack.c.b16 %v1294, %v1293
        %v1310 = vpack.c.b16 %v1296, %v1295
        %v1311 = vpack.c.b16 %v1298, %v1297
        %v1312 = vpack.c.b16 %v1300, %v1299
        %v1313 = vpack.c.b16 %v1302, %v1301
        %v1314 = vpack.c.b16 %v1304, %v1303
        %v1315 = vpack.c.b16 %v1306, %v1305
        %v1316 = vpack.c.b16 %v1308, %v1307
        %1325 = vmatprep.subr.bf16.mxu0 0
        %1326 = vmatpush1.bf16.msra.mxu0 %v1316
        %1327 = vmatprep.subr.bf16.mxu0 0
        %1328 = vmatpush1.bf16.msra.mxu0 %v1315
        %1329 = vmatprep.subr.bf16.mxu0 0
        %1330 = vmatpush1.bf16.msra.mxu0 %v1314
        %1331 = vmatprep.subr.bf16.mxu0 0
        %1332 = vmatpush1.bf16.msra.mxu0 %v1313
        %1333 = vmatprep.subr.bf16.mxu0 0
        %1334 = vmatpush1.bf16.msra.mxu0 %v1312
        %1335 = vmatprep.subr.bf16.mxu0 0
        %1336 = vmatpush1.bf16.msra.mxu0 %v1311
        %1337 = vmatprep.subr.bf16.mxu0 0
        %1338 = vmatpush1.bf16.msra.mxu0 %v1310
        %1339 = vmatprep.subr.bf16.mxu0 0
        %1340 = vmatpush1.bf16.msra.mxu0 %v1309
        %1341 = vmatprep.subr.bf16.mxu0 0
        %1342 = vmatpush2.bf16.msra.mxu0 0
        %1343 = vmatprep.subr.bf16.mxu0 0
        %1344 = vmatpush2.bf16.msra.mxu0 0
        %1345 = vmatprep.subr.bf16.mxu0 0
        %1346 = vmatpush2.bf16.msra.mxu0 0
        %1347 = vmatprep.subr.bf16.mxu0 0
        %1348 = vmatpush2.bf16.msra.mxu0 0
        %1349 = vmatprep.subr.bf16.mxu0 0
        %1350 = vmatpush2.bf16.msra.mxu0 0
        %1351 = vmatprep.subr.bf16.mxu0 0
        %1352 = vmatpush2.bf16.msra.mxu0 0
        %1353 = vmatprep.subr.bf16.mxu0 0
        %1354 = vmatpush2.bf16.msra.mxu0 0
        %1355 = vmatprep.subr.bf16.mxu0 0
        %1356 = vmatpush2.bf16.msra.mxu0 0
        %1357 = vmatprep.mubr.bf16.mxu0 0
        %1358 = vmatmul.mubr.bf16.gmra.mxu0 %v1254
        %v1359 = vpop.f32.mrf.mxu0
        %v1360 = vadd.f32 %v1276, %v1359
        %v1361 = vpop.f32.mrf.mxu0
        %v1362 = vpop.f32.mrf.mxu0
        %v1363 = vadd.f32 %v1276, %v1362
        %v1364 = vpop.f32.mrf.mxu0
        %1365 = vmatprep.mubr.bf16.mxu0 0
        %1366 = vmatmul.mubr.bf16.gmra.mxu0 %v1255
        %v1367 = vpop.f32.mrf.mxu0
        %v1368 = vadd.f32 %v1276, %v1367
        %v1369 = vpop.f32.mrf.mxu0
        %v1370 = vpop.f32.mrf.mxu0
        %v1371 = vadd.f32 %v1276, %v1370
        %v1372 = vpop.f32.mrf.mxu0
        %1373 = vdwg.mxu0
        %v1374 = vmax.f32 %v1360, 0.0
        %v1375 = vmax.f32 %v1363, 0.0
        %v1376 = vmax.f32 %v1368, 0.0
        %v1377 = vmax.f32 %v1371, 0.0
        %v1378 = vpack.c.bf16 %v1375, %v1374
        %v1379 = vpack.c.bf16 %v1377, %v1376
        %s1380 = scalar_lea.vmem [#allocation7], 448
        %v1381 = vld [vmem:[%s1380] sm:$0xf]
        %v1382 = vld [vmem:[%s1380 + $0x4] sm:$0xf]
        %v1383 = vld [vmem:[%s1380 + $0x8] sm:$0xf]
        %v1384 = vld [vmem:[%s1380 + $0xc] sm:$0xf]
        %v1385 = vld [vmem:[%s1380 + $0x10] sm:$0xf]
        %v1386 = vld [vmem:[%s1380 + $0x14] sm:$0xf]
        %v1387 = vld [vmem:[%s1380 + $0x18] sm:$0xf]
        %v1388 = vld [vmem:[%s1380 + $0x1c] sm:$0xf]
        %v1389 = vld [vmem:[%s1380 + $0x20] sm:$0xf]
        %v1390 = vld [vmem:[%s1380 + $0x24] sm:$0xf]
        %v1391 = vld [vmem:[%s1380 + $0x28] sm:$0xf]
        %v1392 = vld [vmem:[%s1380 + $0x2c] sm:$0xf]
        %v1393 = vld [vmem:[%s1380 + $0x30] sm:$0xf]
        %v1394 = vld [vmem:[%s1380 + $0x34] sm:$0xf]
        %v1395 = vld [vmem:[%s1380 + $0x38] sm:$0xf]
        %v1396 = vld [vmem:[%s1380 + $0x3c] sm:$0xf]
        %v1397 = vlaneseq
        %v1398 = vshrl.u32 %v1397, 7
        %v1399 = vsub.s32 7, %v1398
        %v1400 = vrot.slane %v363, %v1399
        %v1417 = vunpack.c.l.b16 %v1381
        %v1418 = vunpack.c.l.b16 %v1382
        %v1419 = vunpack.c.l.b16 %v1383
        %v1420 = vunpack.c.l.b16 %v1384
        %v1421 = vunpack.c.l.b16 %v1385
        %v1422 = vunpack.c.l.b16 %v1386
        %v1423 = vunpack.c.l.b16 %v1387
        %v1424 = vunpack.c.l.b16 %v1388
        %v1425 = vunpack.c.l.b16 %v1389
        %v1426 = vunpack.c.l.b16 %v1390
        %v1427 = vunpack.c.l.b16 %v1391
        %v1428 = vunpack.c.l.b16 %v1392
        %v1429 = vunpack.c.l.b16 %v1393
        %v1430 = vunpack.c.l.b16 %v1394
        %v1431 = vunpack.c.l.b16 %v1395
        %v1432 = vunpack.c.l.b16 %v1396
        %v1433 = vpack.c.b16 %v1418, %v1417
        %v1434 = vpack.c.b16 %v1420, %v1419
        %v1435 = vpack.c.b16 %v1422, %v1421
        %v1436 = vpack.c.b16 %v1424, %v1423
        %v1437 = vpack.c.b16 %v1426, %v1425
        %v1438 = vpack.c.b16 %v1428, %v1427
        %v1439 = vpack.c.b16 %v1430, %v1429
        %v1440 = vpack.c.b16 %v1432, %v1431
        %1449 = vmatprep.subr.bf16.mxu0 0
        %1450 = vmatpush1.bf16.msra.mxu0 %v1440
        %1451 = vmatprep.subr.bf16.mxu0 0
        %1452 = vmatpush1.bf16.msra.mxu0 %v1439
        %1453 = vmatprep.subr.bf16.mxu0 0
        %1454 = vmatpush1.bf16.msra.mxu0 %v1438
        %1455 = vmatprep.subr.bf16.mxu0 0
        %1456 = vmatpush1.bf16.msra.mxu0 %v1437
        %1457 = vmatprep.subr.bf16.mxu0 0
        %1458 = vmatpush1.bf16.msra.mxu0 %v1436
        %1459 = vmatprep.subr.bf16.mxu0 0
        %1460 = vmatpush1.bf16.msra.mxu0 %v1435
        %1461 = vmatprep.subr.bf16.mxu0 0
        %1462 = vmatpush1.bf16.msra.mxu0 %v1434
        %1463 = vmatprep.subr.bf16.mxu0 0
        %1464 = vmatpush1.bf16.msra.mxu0 %v1433
        %1465 = vmatprep.subr.bf16.mxu0 0
        %1466 = vmatpush2.bf16.msra.mxu0 0
        %1467 = vmatprep.subr.bf16.mxu0 0
        %1468 = vmatpush2.bf16.msra.mxu0 0
        %1469 = vmatprep.subr.bf16.mxu0 0
        %1470 = vmatpush2.bf16.msra.mxu0 0
        %1471 = vmatprep.subr.bf16.mxu0 0
        %1472 = vmatpush2.bf16.msra.mxu0 0
        %1473 = vmatprep.subr.bf16.mxu0 0
        %1474 = vmatpush2.bf16.msra.mxu0 0
        %1475 = vmatprep.subr.bf16.mxu0 0
        %1476 = vmatpush2.bf16.msra.mxu0 0
        %1477 = vmatprep.subr.bf16.mxu0 0
        %1478 = vmatpush2.bf16.msra.mxu0 0
        %1479 = vmatprep.subr.bf16.mxu0 0
        %1480 = vmatpush2.bf16.msra.mxu0 0
        %1481 = vmatprep.mubr.bf16.mxu0 0
        %1482 = vmatmul.mubr.bf16.gmra.mxu0 %v1378
        %v1483 = vpop.f32.mrf.mxu0
        %v1484 = vadd.f32 %v1400, %v1483
        %v1485 = vpop.f32.mrf.mxu0
        %v1486 = vpop.f32.mrf.mxu0
        %v1487 = vadd.f32 %v1400, %v1486
        %v1488 = vpop.f32.mrf.mxu0
        %1489 = vmatprep.mubr.bf16.mxu0 0
        %1490 = vmatmul.mubr.bf16.gmra.mxu0 %v1379
        %v1491 = vpop.f32.mrf.mxu0
        %v1492 = vadd.f32 %v1400, %v1491
        %v1493 = vpop.f32.mrf.mxu0
        %v1494 = vpop.f32.mrf.mxu0
        %v1495 = vadd.f32 %v1400, %v1494
        %v1496 = vpop.f32.mrf.mxu0
        %1497 = vdwg.mxu0
        %v1498 = vmax.f32 %v1484, 0.0
        %v1499 = vmax.f32 %v1487, 0.0
        %v1500 = vmax.f32 %v1492, 0.0
        %v1501 = vmax.f32 %v1495, 0.0
        %v1502 = vadd.f32 %v1498, %v1499
        %v1503 = vadd.f32 %v1502, %v1500
        %v1504 = vadd.f32 %v1503, %v1501
        %v1505 = vrot.slane %v1504, 4
        %v1506 = vadd.f32 %v1504, %v1505
        %v1507 = vrot.slane %v1506, 2
        %v1508 = vadd.f32 %v1506, %v1507
        %v1509 = vrot.slane %v1508, 1
        %v1510 = vadd.f32 %v1508, %v1509
        %v1511 = vpack.c.bf16 %v372, %v372
        %v1512 = vpack.c.bf16 %v956, %v956
        %v1513 = vpack.c.bf16 %v1510, %v1510
        %v1514 = vld [vmem:[#allocation10] sm:$0xf]
        %v1515 = vld [vmem:[#allocation10 + $0x4] sm:$0xf]
        %v1516 = vld [vmem:[#allocation10 + $0x8] sm:$0xf]
        %v1517 = vld [vmem:[#allocation10 + $0xc] sm:$0xf]
        %v1518 = vld [vmem:[#allocation10 + $0x10] sm:$0xf]
        %v1519 = vld [vmem:[#allocation10 + $0x14] sm:$0xf]
        %v1520 = vld [vmem:[#allocation10 + $0x18] sm:$0xf]
        %v1521 = vld [vmem:[#allocation10 + $0x1c] sm:$0xf]
        %v1522 = vld [vmem:[#allocation10 + $0x20] sm:$0xf]
        %v1523 = vld [vmem:[#allocation10 + $0x24] sm:$0xf]
        %v1524 = vld [vmem:[#allocation10 + $0x28] sm:$0xf]
        %v1525 = vld [vmem:[#allocation10 + $0x2c] sm:$0xf]
        %v1526 = vld [vmem:[#allocation10 + $0x30] sm:$0xf]
        %v1527 = vld [vmem:[#allocation10 + $0x34] sm:$0xf]
        %v1528 = vld [vmem:[#allocation10 + $0x38] sm:$0xf]
        %v1529 = vld [vmem:[#allocation10 + $0x3c] sm:$0xf]
        %v1530 = vld [vmem:[#allocation10 + $0x40] sm:$0xf]
        %v1531 = vld [vmem:[#allocation10 + $0x44] sm:$0xf]
        %v1532 = vld [vmem:[#allocation10 + $0x48] sm:$0xf]
        %v1533 = vld [vmem:[#allocation10 + $0x4c] sm:$0xf]
        %v1534 = vld [vmem:[#allocation10 + $0x50] sm:$0xf]
        %v1535 = vld [vmem:[#allocation10 + $0x54] sm:$0xf]
        %v1536 = vld [vmem:[#allocation10 + $0x58] sm:$0xf]
        %v1537 = vld [vmem:[#allocation10 + $0x5c] sm:$0xf]
        %v1538 = vld [vmem:[#allocation10 + $0x60] sm:$0xf]
        %v1539 = vld [vmem:[#allocation10 + $0x64] sm:$0xf]
        %v1540 = vld [vmem:[#allocation10 + $0x68] sm:$0xf]
        %v1541 = vld [vmem:[#allocation10 + $0x6c] sm:$0xf]
        %v1542 = vld [vmem:[#allocation10 + $0x70] sm:$0xf]
        %v1543 = vld [vmem:[#allocation10 + $0x74] sm:$0xf]
        %v1544 = vld [vmem:[#allocation10 + $0x78] sm:$0xf]
        %v1545 = vld [vmem:[#allocation10 + $0x7c] sm:$0xf]
        %v1546 = vld [vmem:[#allocation10 + $0x80] sm:$0xf]
        %v1547 = vld [vmem:[#allocation10 + $0x84] sm:$0xf]
        %v1548 = vld [vmem:[#allocation10 + $0x88] sm:$0xf]
        %v1549 = vld [vmem:[#allocation10 + $0x8c] sm:$0xf]
        %v1550 = vld [vmem:[#allocation10 + $0x90] sm:$0xf]
        %v1551 = vld [vmem:[#allocation10 + $0x94] sm:$0xf]
        %v1552 = vld [vmem:[#allocation10 + $0x98] sm:$0xf]
        %v1553 = vld [vmem:[#allocation10 + $0x9c] sm:$0xf]
        %v1554 = vld [vmem:[#allocation10 + $0xa0] sm:$0xf]
        %v1555 = vld [vmem:[#allocation10 + $0xa4] sm:$0xf]
        %v1556 = vld [vmem:[#allocation10 + $0xa8] sm:$0xf]
        %v1557 = vld [vmem:[#allocation10 + $0xac] sm:$0xf]
        %v1558 = vld [vmem:[#allocation10 + $0xb0] sm:$0xf]
        %v1559 = vld [vmem:[#allocation10 + $0xb4] sm:$0xf]
        %v1560 = vld [vmem:[#allocation10 + $0xb8] sm:$0xf]
        %v1561 = vld [vmem:[#allocation10 + $0xbc] sm:$0xf]
        %v1562 = vld [vmem:[%s5] sm:$0x1]
        %v1611 = vunpack.c.l.b16 %v1514
        %v1612 = vunpack.c.l.b16 %v1515
        %v1613 = vunpack.c.l.b16 %v1516
        %v1614 = vunpack.c.l.b16 %v1517
        %v1615 = vunpack.c.l.b16 %v1518
        %v1616 = vunpack.c.l.b16 %v1519
        %v1617 = vunpack.c.l.b16 %v1520
        %v1618 = vunpack.c.l.b16 %v1521
        %v1619 = vunpack.c.l.b16 %v1522
        %v1620 = vunpack.c.l.b16 %v1523
        %v1621 = vunpack.c.l.b16 %v1524
        %v1622 = vunpack.c.l.b16 %v1525
        %v1623 = vunpack.c.l.b16 %v1526
        %v1624 = vunpack.c.l.b16 %v1527
        %v1625 = vunpack.c.l.b16 %v1528
        %v1626 = vunpack.c.l.b16 %v1529
        %v1627 = vunpack.c.l.b16 %v1530
        %v1628 = vunpack.c.l.b16 %v1531
        %v1629 = vunpack.c.l.b16 %v1532
        %v1630 = vunpack.c.l.b16 %v1533
        %v1631 = vunpack.c.l.b16 %v1534
        %v1632 = vunpack.c.l.b16 %v1535
        %v1633 = vunpack.c.l.b16 %v1536
        %v1634 = vunpack.c.l.b16 %v1537
        %v1635 = vunpack.c.l.b16 %v1538
        %v1636 = vunpack.c.l.b16 %v1539
        %v1637 = vunpack.c.l.b16 %v1540
        %v1638 = vunpack.c.l.b16 %v1541
        %v1639 = vunpack.c.l.b16 %v1542
        %v1640 = vunpack.c.l.b16 %v1543
        %v1641 = vunpack.c.l.b16 %v1544
        %v1642 = vunpack.c.l.b16 %v1545
        %v1643 = vunpack.c.l.b16 %v1546
        %v1644 = vunpack.c.l.b16 %v1547
        %v1645 = vunpack.c.l.b16 %v1548
        %v1646 = vunpack.c.l.b16 %v1549
        %v1647 = vunpack.c.l.b16 %v1550
        %v1648 = vunpack.c.l.b16 %v1551
        %v1649 = vunpack.c.l.b16 %v1552
        %v1650 = vunpack.c.l.b16 %v1553
        %v1651 = vunpack.c.l.b16 %v1554
        %v1652 = vunpack.c.l.b16 %v1555
        %v1653 = vunpack.c.l.b16 %v1556
        %v1654 = vunpack.c.l.b16 %v1557
        %v1655 = vunpack.c.l.b16 %v1558
        %v1656 = vunpack.c.l.b16 %v1559
        %v1657 = vunpack.c.l.b16 %v1560
        %v1658 = vunpack.c.l.b16 %v1561
        %v1659 = vpack.c.b16 %v1612, %v1611
        %v1660 = vpack.c.b16 %v1614, %v1613
        %v1661 = vpack.c.b16 %v1616, %v1615
        %v1662 = vpack.c.b16 %v1618, %v1617
        %v1663 = vpack.c.b16 %v1620, %v1619
        %v1664 = vpack.c.b16 %v1622, %v1621
        %v1665 = vpack.c.b16 %v1624, %v1623
        %v1666 = vpack.c.b16 %v1626, %v1625
        %v1667 = vpack.c.b16 %v1628, %v1627
        %v1668 = vpack.c.b16 %v1630, %v1629
        %v1669 = vpack.c.b16 %v1632, %v1631
        %v1670 = vpack.c.b16 %v1634, %v1633
        %v1671 = vpack.c.b16 %v1636, %v1635
        %v1672 = vpack.c.b16 %v1638, %v1637
        %v1673 = vpack.c.b16 %v1640, %v1639
        %v1674 = vpack.c.b16 %v1642, %v1641
        %v1675 = vpack.c.b16 %v1644, %v1643
        %v1676 = vpack.c.b16 %v1646, %v1645
        %v1677 = vpack.c.b16 %v1648, %v1647
        %v1678 = vpack.c.b16 %v1650, %v1649
        %v1679 = vpack.c.b16 %v1652, %v1651
        %v1680 = vpack.c.b16 %v1654, %v1653
        %v1681 = vpack.c.b16 %v1656, %v1655
        %v1682 = vpack.c.b16 %v1658, %v1657
        %1707 = vmatprep.subr.bf16.mxu0 0
        %1708 = vmatpush1.bf16.msra.mxu0 %v1666
        %1709 = vmatprep.subr.bf16.mxu0 0
        %1710 = vmatpush1.bf16.msra.mxu0 %v1665
        %1711 = vmatprep.subr.bf16.mxu0 0
        %1712 = vmatpush1.bf16.msra.mxu0 %v1664
        %1713 = vmatprep.subr.bf16.mxu0 0
        %1714 = vmatpush1.bf16.msra.mxu0 %v1663
        %1715 = vmatprep.subr.bf16.mxu0 0
        %1716 = vmatpush1.bf16.msra.mxu0 %v1662
        %1717 = vmatprep.subr.bf16.mxu0 0
        %1718 = vmatpush1.bf16.msra.mxu0 %v1661
        %1719 = vmatprep.subr.bf16.mxu0 0
        %1720 = vmatpush1.bf16.msra.mxu0 %v1660
        %1721 = vmatprep.subr.bf16.mxu0 0
        %1722 = vmatpush1.bf16.msra.mxu0 %v1659
        %1723 = vmatprep.subr.bf16.mxu0 0
        %1724 = vmatpush2.bf16.msra.mxu0 %v1674
        %1725 = vmatprep.subr.bf16.mxu0 0
        %1726 = vmatpush2.bf16.msra.mxu0 %v1673
        %1727 = vmatprep.subr.bf16.mxu0 0
        %1728 = vmatpush2.bf16.msra.mxu0 %v1672
        %1729 = vmatprep.subr.bf16.mxu0 0
        %1730 = vmatpush2.bf16.msra.mxu0 %v1671
        %1731 = vmatprep.subr.bf16.mxu0 0
        %1732 = vmatpush2.bf16.msra.mxu0 %v1670
        %1733 = vmatprep.subr.bf16.mxu0 0
        %1734 = vmatpush2.bf16.msra.mxu0 %v1669
        %1735 = vmatprep.subr.bf16.mxu0 0
        %1736 = vmatpush2.bf16.msra.mxu0 %v1668
        %1737 = vmatprep.subr.bf16.mxu0 0
        %1738 = vmatpush2.bf16.msra.mxu0 %v1667
        %1739 = vmatprep.mubr.bf16.mxu0 %v1512
        %1740 = vmatmul.mubr.bf16.gmra.mxu0 %v1511
        %v1741 = vpop.f32.mrf.mxu0
        %v1742 = vadd.f32 %v1562, %v1741
        %v1743 = vpop.f32.mrf.mxu0
        %v1744 = vpop.f32.mrf.mxu0
        %v1745 = vpop.f32.mrf.mxu0
        %1746 = vdwg.mxu0
        %1747 = vmatprep.subr.bf16.mxu0 0
        %1748 = vmatpush1.bf16.msra.mxu0 %v1682
        %1749 = vmatprep.subr.bf16.mxu0 0
        %1750 = vmatpush1.bf16.msra.mxu0 %v1681
        %1751 = vmatprep.subr.bf16.mxu0 0
        %1752 = vmatpush1.bf16.msra.mxu0 %v1680
        %1753 = vmatprep.subr.bf16.mxu0 0
        %1754 = vmatpush1.bf16.msra.mxu0 %v1679
        %1755 = vmatprep.subr.bf16.mxu0 0
        %1756 = vmatpush1.bf16.msra.mxu0 %v1678
        %1757 = vmatprep.subr.bf16.mxu0 0
        %1758 = vmatpush1.bf16.msra.mxu0 %v1677
        %1759 = vmatprep.subr.bf16.mxu0 0
        %1760 = vmatpush1.bf16.msra.mxu0 %v1676
        %1761 = vmatprep.subr.bf16.mxu0 0
        %1762 = vmatpush1.bf16.msra.mxu0 %v1675
        %1763 = vmatprep.subr.bf16.mxu0 0
        %1764 = vmatpush2.bf16.msra.mxu0 0
        %1765 = vmatprep.subr.bf16.mxu0 0
        %1766 = vmatpush2.bf16.msra.mxu0 0
        %1767 = vmatprep.subr.bf16.mxu0 0
        %1768 = vmatpush2.bf16.msra.mxu0 0
        %1769 = vmatprep.subr.bf16.mxu0 0
        %1770 = vmatpush2.bf16.msra.mxu0 0
        %1771 = vmatprep.subr.bf16.mxu0 0
        %1772 = vmatpush2.bf16.msra.mxu0 0
        %1773 = vmatprep.subr.bf16.mxu0 0
        %1774 = vmatpush2.bf16.msra.mxu0 0
        %1775 = vmatprep.subr.bf16.mxu0 0
        %1776 = vmatpush2.bf16.msra.mxu0 0
        %1777 = vmatprep.subr.bf16.mxu0 0
        %1778 = vmatpush2.bf16.msra.mxu0 0
        %1779 = vmatprep.mubr.bf16.mxu0 0
        %1780 = vmatmul.mubr.bf16.gmra.mxu0 %v1513
        %v1781 = vpop.f32.mrf.mxu0
        %v1782 = vadd.f32 %v1742, %v1781
        %v1783 = vpop.f32.mrf.mxu0
        %v1784 = vpop.f32.mrf.mxu0
        %v1785 = vpop.f32.mrf.mxu0
        %1786 = vdwg.mxu0
        %1787 = vst [vmem:[%s349] sm:$0x1] %v1782
        %s1788 = sand.u32 %s171, 1
        %s1789 = scalar_lea.sflag [#allocation4], %s1788
        %s1790 = sand.u32 %s171, 1
        %s1791 = scalar_lea.vmem [#allocation11], %s1790
        // Predicated region
        $region65: #{gin_forward.1} parent=43 // pred_check
          %p1792 = pneg %p181
        $region66: #{gin_forward.1} parent=43 // pred_check_branch
          %1794 = sbr.rel (%p1792) target = $region68
        $region67: #{gin_forward.1} parent=43 // pred_region
          %s1796 = ssub.s32 16, 16
          %1797 = vsyncadd %s1789, %s1796
          %s1798 = smul.addr %s27, 16
          %s1799 = scalar_lea.hbm %s6, %s1798
          %s1801 = sshll.u32 %s1791, 4
          %s1802 = int_to_ptr.vmem [resolvable:$true] %s1801
          %1804 = dma.vmem_to_hbm [thread:$0]  %s1802, 16, %s1799, %s1789
        $region68: #{gin_forward.1} parent=43 // pred_fallthru
          _
      $region44: #{gin_forward.1} parent=5 // pred_fallthru
        _
      %p1805 = scmp.le.s32.totalorder 2, %s22
      // Predicated region
      $region69: #{gin_forward.1} parent=5 // pred_check
        %p1806 = pneg %p1805
      $region70: #{gin_forward.1} parent=5 // pred_check_branch
        %1808 = sbr.rel (%p1806) target = $region72
      $region71: #{gin_forward.1} parent=5 // pred_region
        %s1809 = ssub.s32 %s22, 2
        // Predicated region
        $region73: #{gin_forward.1} parent=71 // pred_check
          %p1810 = pneg %p187
        $region74: #{gin_forward.1} parent=71 // pred_check_branch
          %1812 = sbr.rel (%p1810) target = $region76
        $region75: #{gin_forward.1} parent=71 // pred_region
          %s1813 = sand.u32 %s172, 1
          %s1814 = scalar_lea.sflag [#allocation4], %s1813
          %s1815 = sand.u32 %s172, 1
          %s1816 = scalar_lea.vmem [#allocation11], %s1815
          %1817 = dma.done %s1814, 16
        $region76: #{gin_forward.1} parent=71 // pred_fallthru
          _
      $region72: #{gin_forward.1} parent=5 // pred_fallthru
        _
    $region6: #{gin_forward.1} parent=1 // loop_footer
      %s26 = sadd.s32 1, %s22
    $region7: #{gin_forward.1} parent=1 // loop_footer_branch
      %21 = sbr.rel target = $region3
    $region8: #{gin_forward.1} parent=1 // loop_exit
      _
    %1818 = vsyncpa [#allocation3], 1
    %s1819 = scalar_lea.sflag [#allocation3], 1
    %1820 = vsyncpa %s1819, 1
    %1821 = vsyncpa [#allocation6], 1
    %s1822 = scalar_lea.sflag [#allocation6], 1
    %1823 = vsyncpa %s1822, 1
    %1824 = vsyncpa [#allocation9], 1
    %1825 = vsyncpa [#allocation4], 1
    %s1826 = scalar_lea.sflag [#allocation4], 1
    %1827 = vsyncpa %s1826, 1

</llo_original>
